<compile_context>
chip_gen: v5e
topology: v5e:2x2
jax: 0.10.0
libtpu: 0.0.40
codegen_flags: <defaults>
</compile_context>

<pallas_src>
import functools

import jax
import jax.numpy as jnp
from jax.experimental import pallas as pl
from jax.experimental.pallas import tpu as pltpu


# ----------------------------- small helpers --------------------------------

def _round_up(n, m):
    return (n + m - 1) // m * m


def _cdiv(a, b):
    return -(-a // b)


def _row_tiling(m, tile_rows, min_steps=8):
    """Pick (rows_per_tile, padded_rows, grid_steps).

    Keeps grid_steps >= min_steps when possible (v7x megacore + pipelining)
    and limits padded junk rows to < one 8-row sublane per grid step.
    """
    m8 = _round_up(max(m, 8), 8)
    steps = max(1, _cdiv(m8, tile_rows))
    steps = max(steps, min(min_steps, m8 // 8))
    tm = _round_up(_cdiv(m8, steps), 8)
    mp = steps * tm
    return tm, mp, steps


def _block_diag(blocks):
    """Dense block-diagonal matrix from a list of 2-D blocks (pure jnp)."""
    if len(blocks) == 1:
        return blocks[0]
    rows = sum(b.shape[0] for b in blocks)
    cols = sum(b.shape[1] for b in blocks)
    out = jnp.zeros((rows, cols), blocks[0].dtype)
    r = c = 0
    for b in blocks:
        out = out.at[r:r + b.shape[0], c:c + b.shape[1]].set(b)
        r += b.shape[0]
        c += b.shape[1]
    return out


def _erf(x):
    # Abramowitz-Stegun 7.1.26 rational approximation (|err| < 1.5e-7), built
    # from exp (EUP) + approx reciprocal (EUP) + VPU arithmetic.
    a1, a2, a3, a4, a5 = 0.254829592, -0.284496736, 1.421413741, -1.453152027, 1.061405429
    p = 0.3275911
    s = jnp.where(x >= 0.0, 1.0, -1.0)
    z = jnp.abs(x)
    t = pl.reciprocal(1.0 + p * z, approx=True)     # EUP slot, ~free vs VALU divide
    poly = ((((a5 * t + a4) * t + a3) * t + a2) * t + a1) * t
    return s * (1.0 - poly * jnp.exp(-z * z))


def _gelu_exact(x):
    # torch.nn.functional.gelu default (erf-based, not tanh approximation).
    return 0.5 * x * (1.0 + _erf(x * 0.7071067811865476))


def _softshrink(x, lam):
    return jnp.where(x > lam, x - lam, jnp.where(x < -lam, x + lam, 0.0))


# ------------------------------ Pallas kernels -------------------------------

def _spectral_kernel(lam, x_ref, w1_ref, b1_ref, w2_ref, b2_ref, o_ref):
    """Fused complex block-diag MLP + softshrink on a tile of spectral tokens.

    x_ref : (TM, 2C)   packed [xr | xi], compute dtype (bf16)
    w1_ref: (2C, 2H)   packed [[W1r, W1i], [-W1i, W1r]]   (one MXU dot replaces
    w2_ref: (2H, 2C)   packed [[W2r, W2i], [-W2i, W2r]]    the 4 real dots)
    o_ref : (TM, 2C)   packed [o2r | o2i]
    """
    h = jnp.dot(x_ref[...], w1_ref[...], preferred_element_type=jnp.float32)
    h = _gelu_exact(h + b1_ref[...])                # gelu applied to both halves
    o = jnp.dot(h.astype(w2_ref.dtype), w2_ref[...],
                preferred_element_type=jnp.float32) + b2_ref[...]
    # NOTE: softshrink is applied before the (optional) hard-threshold mask in
    # the wrapper; equivalent to the reference (softshrink(0) == 0).
    o_ref[...] = _softshrink(o, lam).astype(o_ref.dtype)


def _mlp_kernel(s_ref, x_ref, w1_ref, b1_ref, w2_ref, b2_ref, o_ref):
    """Channel-mixer MLP with the fno residual add (spec + x) fused in."""
    h = s_ref[...].astype(jnp.float32) + x_ref[...].astype(jnp.float32)
    a = jnp.dot(h.astype(w1_ref.dtype), w1_ref[...],
                preferred_element_type=jnp.float32) + b1_ref[...]
    a = _gelu_exact(a)
    o = jnp.dot(a.astype(w2_ref.dtype), w2_ref[...],
                preferred_element_type=jnp.float32) + b2_ref[...]
    o_ref[...] = o.astype(o_ref.dtype)


# --------------------------------- wrapper -----------------------------------

def afno_boundaries_block_forward(x, params, *, num_blocks=1,
                                  sparsity_threshold=0.01,
                                  hard_thresholding_fraction=1.0,
                                  compute_dtype=jnp.bfloat16,
                                  tile_rows=512,
                                  min_grid_steps=8,
                                  vmem_limit_bytes=48 * 1024 * 1024):
    """x: (B, H, W, C) like the PyTorch module. Returns (B, H, W, C)."""
    orig_dtype = x.dtype
    x32 = x.astype(jnp.float32)
    B, H, W, C = x.shape
    Wf = W // 2 + 1
    nb = num_blocks
    w1, b1, w2, b2 = params["w1"], params["b1"], params["w2"], params["b2"]
    hid = nb * w1.shape[-1]                    # C * hidden_size_factor
    isz = jnp.dtype(compute_dtype).itemsize

    # ---- 1. spectral transform (plain JAX; no Pallas FFT primitive) ----
    xf = jnp.fft.rfft2(x32, axes=(1, 2), norm="ortho")        # (B,H,Wf,C) c64

    # packed [real | imag] slab: one lane-dense bf16 stream in and out
    Ms = B * H * Wf
    tm_s, Msp, steps_s = _row_tiling(Ms, tile_rows, min_grid_steps)
    x_packed = jnp.concatenate([jnp.real(xf), jnp.imag(xf)], axis=-1)
    x_packed = x_packed.reshape(Ms, 2 * C).astype(compute_dtype)
    x_packed = jnp.pad(x_packed, ((0, Msp - Ms), (0, 0)))

    # densify block-diagonal weights (nb=1 -> no waste), then pack the complex
    # matmul:  [xr | xi] @ [[Wr, Wi], [-Wi, Wr]]  =  [or | oi]
    w1r = _block_diag([w1[0, b] for b in range(nb)])           # (C, hid)
    w1i = _block_diag([w1[1, b] for b in range(nb)])
    w2r = _block_diag([w2[0, b] for b in range(nb)])           # (hid, C)
    w2i = _block_diag([w2[1, b] for b in range(nb)])
    w1p = jnp.concatenate([jnp.concatenate([w1r, w1i], axis=1),
                           jnp.concatenate([-w1i, w1r], axis=1)],
                          axis=0).astype(compute_dtype)        # (2C, 2hid)
    w2p = jnp.concatenate([jnp.concatenate([w2r, w2i], axis=1),
                           jnp.concatenate([-w2i, w2r], axis=1)],
                          axis=0).astype(compute_dtype)        # (2hid, 2C)
    b1p = jnp.concatenate([b1[0].reshape(-1), b1[1].reshape(-1)]
                          ).reshape(1, 2 * hid).astype(jnp.float32)
    b2p = jnp.concatenate([b2[0].reshape(-1), b2[1].reshape(-1)]
                          ).reshape(1, 2 * C).astype(jnp.float32)

    spec_cost = pl.CostEstimate(
        flops=2 * 2 * Msp * (2 * C) * (2 * hid),
        transcendentals=2 * Msp * (2 * hid),
        bytes_accessed=(2 * Msp * 2 * C) * isz
                       + 2 * (2 * C) * (2 * hid) * isz
                       + (2 * hid + 2 * C) * 4)

    o_packed = pl.pallas_call(
        functools.partial(_spectral_kernel, float(sparsity_threshold)),
        out_shape=jax.ShapeDtypeStruct((Msp, 2 * C), compute_dtype),
        grid_spec=pltpu.PrefetchScalarGridSpec(
            num_scalar_prefetch=0,
            grid=(steps_s,),
            in_specs=[
                pl.BlockSpec((tm_s, 2 * C), lambda i: (i, 0)),        # spectrum tile
                pl.BlockSpec((2 * C, 2 * hid), lambda i: (0, 0)),     # w1 packed (resident)
                pl.BlockSpec((1, 2 * hid), lambda i: (0, 0)),         # b1 packed
                pl.BlockSpec((2 * hid, 2 * C), lambda i: (0, 0)),     # w2 packed (resident)
                pl.BlockSpec((1, 2 * C), lambda i: (0, 0)),           # b2 packed
            ],
            out_specs=pl.BlockSpec((tm_s, 2 * C), lambda i: (i, 0))),
        compiler_params=pltpu.CompilerParams(
            dimension_semantics=("parallel",),
            vmem_limit_bytes=vmem_limit_bytes),
        cost_estimate=spec_cost,
    )(x_packed, w1p, b1p, w2p, b2p)

    o_packed = o_packed[:Ms].astype(jnp.float32)
    o_r = o_packed[:, :C].reshape(B, H, Wf, C)
    o_i = o_packed[:, C:].reshape(B, H, Wf, C)

    # hard-thresholding mask (skipped entirely when it keeps everything).
    # Kernel softshrinks before masking; reference masks first -- equivalent
    # because softshrink(0) == 0 and masked entries are re-zeroed here.
    total_modes = H // 2 + 1
    kept_modes = int(total_modes * hard_thresholding_fraction)
    full_keep = (total_modes - kept_modes <= 0
                 and total_modes + kept_modes >= H
                 and kept_modes >= Wf)
    if not full_keep:
        hm = jnp.arange(H)[None, :, None, None]
        wm = jnp.arange(Wf)[None, None, :, None]
        keep = ((hm >= total_modes - kept_modes)
                & (hm < total_modes + kept_modes)
                & (wm < kept_modes))
        o_r = jnp.where(keep, o_r, 0.0)
        o_i = jnp.where(keep, o_i, 0.0)

    spec = jnp.fft.irfft2(jax.lax.complex(o_r, o_i), s=(H, W), axes=(1, 2),
                          norm="ortho")

    # ---- channel-mixer MLP, fno residual add fused into the kernel ----
    fc1_w, fc1_b = params["fc1_w"], params["fc1_b"]
    fc2_w, fc2_b = params["fc2_w"], params["fc2_b"]
    mid = fc1_w.shape[0]
    Mm = B * H * W
    tm_m, Mmp, steps_m = _row_tiling(Mm, tile_rows, min_grid_steps)

    # bf16 activation streaming (kernel B is HBM-bound -> halve input bytes)
    s2 = jnp.pad(spec.reshape(Mm, C).astype(compute_dtype),
                 ((0, Mmp - Mm), (0, 0)))
    x2 = jnp.pad(x32.reshape(Mm, C).astype(compute_dtype),
                 ((0, Mmp - Mm), (0, 0)))
    w1m = fc1_w.T.astype(compute_dtype)                  # (C, mid)
    b1m = fc1_b.reshape(1, mid).astype(jnp.float32)
    w2m = fc2_w.T.astype(compute_dtype)                  # (mid, C)
    b2m = fc2_b.reshape(1, C).astype(jnp.float32)

    mlp_cost = pl.CostEstimate(
        flops=2 * 2 * Mmp * C * mid,
        transcendentals=Mmp * mid,
        bytes_accessed=2 * Mmp * C * isz + Mmp * C * 4
                       + 2 * C * mid * isz + (mid + C) * 4)

    out = pl.pallas_call(
        _mlp_kernel,
        out_shape=jax.ShapeDtypeStruct((Mmp, C), jnp.float32),
        grid_spec=pltpu.PrefetchScalarGridSpec(
            num_scalar_prefetch=0,
            grid=(steps_m,),
            in_specs=[
                pl.BlockSpec((tm_m, C), lambda i: (i, 0)),     # spectral out tile
                pl.BlockSpec((tm_m, C), lambda i: (i, 0)),     # residual x tile
                pl.BlockSpec((C, mid), lambda i: (0, 0)),      # fc1 weight (resident)
                pl.BlockSpec((1, mid), lambda i: (0, 0)),      # fc1 bias
                pl.BlockSpec((mid, C), lambda i: (0, 0)),      # fc2 weight (resident)
                pl.BlockSpec((1, C), lambda i: (0, 0)),        # fc2 bias
            ],
            out_specs=pl.BlockSpec((tm_m, C), lambda i: (i, 0))),
        compiler_params=pltpu.CompilerParams(
            dimension_semantics=("parallel",),
            vmem_limit_bytes=vmem_limit_bytes),
        cost_estimate=mlp_cost,
    )(s2, x2, w1m, b1m, w2m, b2m)

    out = out[:Mm].reshape(B, H, W, C).astype(orig_dtype)
    return out                                   # output_activation = Identity


# ------------------------------ pure-JAX reference ---------------------------

def _reference_forward(x, params, num_blocks, sparsity_threshold,
                       hard_thresholding_fraction):
    B, H, W, C = x.shape
    nb = num_blocks
    bs = C // nb
    w1, b1, w2, b2 = params["w1"], params["b1"], params["w2"], params["b2"]
    x32 = x.astype(jnp.float32)
    xf = jnp.fft.rfft2(x32, axes=(1, 2), norm="ortho")
    Wf = W // 2 + 1
    xb = xf.reshape(B, H, Wf, nb, bs)
    xr, xi = jnp.real(xb), jnp.imag(xb)
    total_modes = H // 2 + 1
    kept = int(total_modes * hard_thresholding_fraction)
    gelu = lambda v: jax.nn.gelu(v, approximate=False)
    o1r = gelu(jnp.einsum("...bi,bio->...bo", xr, w1[0])
               - jnp.einsum("...bi,bio->...bo", xi, w1[1]) + b1[0])
    o1i = gelu(jnp.einsum("...bi,bio->...bo", xi, w1[0])
               + jnp.einsum("...bi,bio->...bo", xr, w1[1]) + b1[1])
    o2r = (jnp.einsum("...bi,bio->...bo", o1r, w2[0])
           - jnp.einsum("...bi,bio->...bo", o1i, w2[1]) + b2[0])
    o2i = (jnp.einsum("...bi,bio->...bo", o1i, w2[0])
           + jnp.einsum("...bi,bio->...bo", o1r, w2[1]) + b2[1])
    hm = jnp.arange(H)[None, :, None, None, None]
    wm = jnp.arange(Wf)[None, None, :, None, None]
    keep = ((hm >= total_modes - kept) & (hm < total_modes + kept) & (wm < kept))
    o2r = jnp.where(keep, o2r, 0.0)
    o2i = jnp.where(keep, o2i, 0.0)
    soft = lambda v: jnp.sign(v) * jnp.maximum(jnp.abs(v) - sparsity_threshold, 0.0)
    o2r, o2i = soft(o2r), soft(o2i)
    spec = jnp.fft.irfft2(jax.lax.complex(o2r, o2i).reshape(B, H, Wf, C),
                          s=(H, W), axes=(1, 2), norm="ortho")
    h = spec + x32                                  # fno residual
    a = gelu(h @ params["fc1_w"].T + params["fc1_b"])
    out = a @ params["fc2_w"].T + params["fc2_b"]
    return out.astype(x.dtype)


# ----------------------------------- main -------------------------------------

if __name__ == "__main__":
    B, H, W, C = 2, 16, 16, 32
    num_blocks = 1                     # AFNOBoundariesBlock default
    mlp_ratio = 4
    sparsity_threshold = 0.01
    hard_thresholding_fraction = 1.0
    hsf = 1                            # SpectralConvBlockDiag default
    bs = C // num_blocks
    mid = C * mlp_ratio

    key = jax.random.PRNGKey(0)
    keys = jax.random.split(key, 9)
    x = jax.random.normal(keys[0], (B, H, W, C), dtype=jnp.float32)
    scale = 0.02
    params = {
        "w1": scale * jax.random.normal(keys[1], (2, num_blocks, bs, bs * hsf), jnp.float32),
        "b1": scale * jax.random.normal(keys[2], (2, num_blocks, bs * hsf), jnp.float32),
        "w2": scale * jax.random.normal(keys[3], (2, num_blocks, bs * hsf, bs), jnp.float32),
        "b2": scale * jax.random.normal(keys[4], (2, num_blocks, bs), jnp.float32),
        "fc1_w": 0.05 * jax.random.normal(keys[5], (mid, C), jnp.float32),
        "fc1_b": 0.05 * jax.random.normal(keys[6], (mid,), jnp.float32),
        "fc2_w": 0.05 * jax.random.normal(keys[7], (C, mid), jnp.float32),
        "fc2_b": 0.05 * jax.random.normal(keys[8], (C,), jnp.float32),
    }

    fwd = jax.jit(functools.partial(
        afno_boundaries_block_forward,
        num_blocks=num_blocks,
        sparsity_threshold=sparsity_threshold,
        hard_thresholding_fraction=hard_thresholding_fraction,
        compute_dtype=jnp.bfloat16,    # MXU-native operands; f32 accumulation
        tile_rows=512))

    out = jax.block_until_ready(fwd(x, params))

    ref = _reference_forward(x, params, num_blocks, sparsity_threshold,
                             hard_thresholding_fraction)
    assert out.shape == (B, H, W, C)
    max_err = float(jnp.max(jnp.abs(out - ref)))
    assert jnp.allclose(out, ref, atol=2e-2, rtol=2e-2), f"max abs err {max_err}"
    print("KERNEL_OK")
</pallas_src>

<mosaic_0001>
module attributes {stable_mosaic.version = 11 : i64} {
  func.func @_spectral_kernel(%arg0: i32, %arg1: memref<40x64xbf16, #tpu.memory_space<vmem>>, %arg2: memref<64x64xbf16, #tpu.memory_space<vmem>>, %arg3: memref<1x64xf32, #tpu.memory_space<vmem>>, %arg4: memref<64x64xbf16, #tpu.memory_space<vmem>>, %arg5: memref<1x64xf32, #tpu.memory_space<vmem>>, %arg6: memref<40x64xbf16, #tpu.memory_space<vmem>>) attributes {dimension_semantics = [#tpu.dimension_semantics<parallel>], iteration_bounds = array<i64: 8>, scalar_prefetch = 0 : i64, scratch_operands = 0 : i64, tpu.core_type = #tpu.core_type<tc>, window_params = [{transform_indices = @transform_0, window_bounds = array<i64: 40, 64>}, {pipeline_mode = #tpu.pipeline_mode<synchronous>, transform_indices = @transform_1, window_bounds = array<i64: 64, 64>}, {pipeline_mode = #tpu.pipeline_mode<synchronous>, transform_indices = @transform_2, window_bounds = array<i64: 1, 64>}, {pipeline_mode = #tpu.pipeline_mode<synchronous>, transform_indices = @transform_3, window_bounds = array<i64: 64, 64>}, {pipeline_mode = #tpu.pipeline_mode<synchronous>, transform_indices = @transform_4, window_bounds = array<i64: 1, 64>}, {transform_indices = @transform_5, window_bounds = array<i64: 40, 64>}]} {
    %c0 = arith.constant 0 : index
    %c0_0 = arith.constant 0 : index
    %0 = vector.load %arg1[%c0, %c0_0] : memref<40x64xbf16, #tpu.memory_space<vmem>>, vector<40x64xbf16>
    %c0_1 = arith.constant 0 : index
    %c0_2 = arith.constant 0 : index
    %1 = vector.load %arg2[%c0_1, %c0_2] : memref<64x64xbf16, #tpu.memory_space<vmem>>, vector<64x64xbf16>
    %cst = arith.constant dense<0.000000e+00> : vector<40x64xf32>
    %2 = tpu.matmul %0, %1, %cst {dimension_numbers = #tpu.dot_dimension_numbers<[1], [0], [0], [1], [0, 0, 1, 1], [], []>} : vector<40x64xbf16>, vector<64x64xbf16>, vector<40x64xf32> -> vector<40x64xf32>
    %c0_3 = arith.constant 0 : index
    %c0_4 = arith.constant 0 : index
    %3 = vector.load %arg3[%c0_3, %c0_4] : memref<1x64xf32, #tpu.memory_space<vmem>>, vector<1x64xf32>
    %4 = vector.broadcast %3 : vector<1x64xf32> to vector<40x64xf32>
    %5 = arith.addf %2, %4 : vector<40x64xf32>
    %cst_5 = arith.constant 5.000000e-01 : f32
    %6 = vector.broadcast %cst_5 : f32 to vector<40x64xf32>
    %7 = arith.mulf %6, %5 : vector<40x64xf32>
    %cst_6 = arith.constant 0.707106769 : f32
    %8 = vector.broadcast %cst_6 : f32 to vector<40x64xf32>
    %9 = arith.mulf %5, %8 : vector<40x64xf32>
    %cst_7 = arith.constant 0.000000e+00 : f32
    %10 = vector.broadcast %cst_7 : f32 to vector<40x64xf32>
    %11 = arith.cmpf oge, %9, %10 : vector<40x64xf32>
    %cst_8 = arith.constant 1.000000e+00 : f32
    %cst_9 = arith.constant -1.000000e+00 : f32
    %12 = vector.broadcast %cst_8 : f32 to vector<40x64xf32>
    %13 = vector.broadcast %cst_9 : f32 to vector<40x64xf32>
    %14 = arith.select %11, %12, %13 : vector<40x64xi1>, vector<40x64xf32>
    %15 = math.absf %9 : vector<40x64xf32>
    %cst_10 = arith.constant 0.327591091 : f32
    %16 = vector.broadcast %cst_10 : f32 to vector<40x64xf32>
    %17 = arith.mulf %16, %15 : vector<40x64xf32>
    %cst_11 = arith.constant 1.000000e+00 : f32
    %18 = vector.broadcast %cst_11 : f32 to vector<40x64xf32>
    %19 = arith.addf %18, %17 : vector<40x64xf32>
    %20 = tpu.reciprocal %19 {approx = true} : vector<40x64xf32> -> vector<40x64xf32>
    %cst_12 = arith.constant 1.06140542 : f32
    %21 = vector.broadcast %cst_12 : f32 to vector<40x64xf32>
    %22 = arith.mulf %21, %20 : vector<40x64xf32>
    %cst_13 = arith.constant -1.45315206 : f32
    %23 = vector.broadcast %cst_13 : f32 to vector<40x64xf32>
    %24 = arith.addf %22, %23 : vector<40x64xf32>
    %25 = arith.mulf %24, %20 : vector<40x64xf32>
    %cst_14 = arith.constant 1.42141378 : f32
    %26 = vector.broadcast %cst_14 : f32 to vector<40x64xf32>
    %27 = arith.addf %25, %26 : vector<40x64xf32>
    %28 = arith.mulf %27, %20 : vector<40x64xf32>
    %cst_15 = arith.constant -0.284496725 : f32
    %29 = vector.broadcast %cst_15 : f32 to vector<40x64xf32>
    %30 = arith.addf %28, %29 : vector<40x64xf32>
    %31 = arith.mulf %30, %20 : vector<40x64xf32>
    %cst_16 = arith.constant 0.254829586 : f32
    %32 = vector.broadcast %cst_16 : f32 to vector<40x64xf32>
    %33 = arith.addf %31, %32 : vector<40x64xf32>
    %34 = arith.mulf %33, %20 : vector<40x64xf32>
    %cst_17 = arith.constant 0.000000e+00 : f32
    %35 = vector.broadcast %cst_17 : f32 to vector<40x64xf32>
    %36 = arith.subf %35, %15 : vector<40x64xf32>
    %37 = arith.mulf %36, %15 : vector<40x64xf32>
    %38 = math.exp %37 : vector<40x64xf32>
    %39 = arith.mulf %34, %38 : vector<40x64xf32>
    %cst_18 = arith.constant 1.000000e+00 : f32
    %40 = vector.broadcast %cst_18 : f32 to vector<40x64xf32>
    %41 = arith.subf %40, %39 : vector<40x64xf32>
    %42 = arith.mulf %14, %41 : vector<40x64xf32>
    %cst_19 = arith.constant 1.000000e+00 : f32
    %43 = vector.broadcast %cst_19 : f32 to vector<40x64xf32>
    %44 = arith.addf %43, %42 : vector<40x64xf32>
    %45 = arith.mulf %7, %44 : vector<40x64xf32>
    %46 = arith.truncf %45 : vector<40x64xf32> to vector<40x64xbf16>
    %c0_20 = arith.constant 0 : index
    %c0_21 = arith.constant 0 : index
    %47 = vector.load %arg4[%c0_20, %c0_21] : memref<64x64xbf16, #tpu.memory_space<vmem>>, vector<64x64xbf16>
    %cst_22 = arith.constant dense<0.000000e+00> : vector<40x64xf32>
    %48 = tpu.matmul %46, %47, %cst_22 {dimension_numbers = #tpu.dot_dimension_numbers<[1], [0], [0], [1], [0, 0, 1, 1], [], []>} : vector<40x64xbf16>, vector<64x64xbf16>, vector<40x64xf32> -> vector<40x64xf32>
    %c0_23 = arith.constant 0 : index
    %c0_24 = arith.constant 0 : index
    %49 = vector.load %arg5[%c0_23, %c0_24] : memref<1x64xf32, #tpu.memory_space<vmem>>, vector<1x64xf32>
    %50 = vector.broadcast %49 : vector<1x64xf32> to vector<40x64xf32>
    %51 = arith.addf %48, %50 : vector<40x64xf32>
    %cst_25 = arith.constant 0.00999999977 : f32
    %52 = vector.broadcast %cst_25 : f32 to vector<40x64xf32>
    %53 = arith.cmpf ogt, %51, %52 : vector<40x64xf32>
    %cst_26 = arith.constant 0.00999999977 : f32
    %54 = vector.broadcast %cst_26 : f32 to vector<40x64xf32>
    %55 = arith.subf %51, %54 : vector<40x64xf32>
    %cst_27 = arith.constant -0.00999999977 : f32
    %56 = vector.broadcast %cst_27 : f32 to vector<40x64xf32>
    %57 = arith.cmpf olt, %51, %56 : vector<40x64xf32>
    %cst_28 = arith.constant 0.00999999977 : f32
    %58 = vector.broadcast %cst_28 : f32 to vector<40x64xf32>
    %59 = arith.addf %51, %58 : vector<40x64xf32>
    %cst_29 = arith.constant 0.000000e+00 : f32
    %60 = vector.broadcast %cst_29 : f32 to vector<40x64xf32>
    %61 = arith.select %57, %59, %60 : vector<40x64xi1>, vector<40x64xf32>
    %62 = arith.select %53, %55, %61 : vector<40x64xi1>, vector<40x64xf32>
    %63 = arith.truncf %62 : vector<40x64xf32> to vector<40x64xbf16>
    %c0_30 = arith.constant 0 : index
    %c0_31 = arith.constant 0 : index
    %64 = vector.load %arg6[%c0_30, %c0_31] : memref<40x64xbf16, #tpu.memory_space<vmem>>, vector<40x64xbf16>
    tpu.vector_store %arg6[%c0_30, %c0_31], %63 {strides = array<i32>} : memref<40x64xbf16, #tpu.memory_space<vmem>>, vector<40x64xbf16>,
    return
  }
  func.func @transform_0(%arg0: i32) -> (i32, i32) {
    %c0_i32 = arith.constant 0 : i32
    %c0_i32_0 = arith.constant 0 : i32
    return %arg0, %c0_i32 : i32, i32
  }
  func.func @transform_1(%arg0: i32) -> (i32, i32) {
    %c0_i32 = arith.constant 0 : i32
    %c0_i32_0 = arith.constant 0 : i32
    %c0_i32_1 = arith.constant 0 : i32
    return %c0_i32, %c0_i32_0 : i32, i32
  }
  func.func @transform_2(%arg0: i32) -> (i32, i32) {
    %c0_i32 = arith.constant 0 : i32
    %c0_i32_0 = arith.constant 0 : i32
    %c0_i32_1 = arith.constant 0 : i32
    return %c0_i32, %c0_i32_0 : i32, i32
  }
  func.func @transform_3(%arg0: i32) -> (i32, i32) {
    %c0_i32 = arith.constant 0 : i32
    %c0_i32_0 = arith.constant 0 : i32
    %c0_i32_1 = arith.constant 0 : i32
    return %c0_i32, %c0_i32_0 : i32, i32
  }
  func.func @transform_4(%arg0: i32) -> (i32, i32) {
    %c0_i32 = arith.constant 0 : i32
    %c0_i32_0 = arith.constant 0 : i32
    %c0_i32_1 = arith.constant 0 : i32
    return %c0_i32, %c0_i32_0 : i32, i32
  }
  func.func @transform_5(%arg0: i32) -> (i32, i32) {
    %c0_i32 = arith.constant 0 : i32
    %c0_i32_0 = arith.constant 0 : i32
    return %arg0, %c0_i32 : i32, i32
  }
}

module attributes {stable_mosaic.version = 11 : i64} {
  func.func @_mlp_kernel(%arg0: i32, %arg1: memref<64x32xbf16, #tpu.memory_space<vmem>>, %arg2: memref<64x32xbf16, #tpu.memory_space<vmem>>, %arg3: memref<32x128xbf16, #tpu.memory_space<vmem>>, %arg4: memref<1x128xf32, #tpu.memory_space<vmem>>, %arg5: memref<128x32xbf16, #tpu.memory_space<vmem>>, %arg6: memref<1x32xf32, #tpu.memory_space<vmem>>, %arg7: memref<64x32xf32, #tpu.memory_space<vmem>>) attributes {dimension_semantics = [#tpu.dimension_semantics<parallel>], iteration_bounds = array<i64: 8>, scalar_prefetch = 0 : i64, scratch_operands = 0 : i64, tpu.core_type = #tpu.core_type<tc>, window_params = [{transform_indices = @transform_0, window_bounds = array<i64: 64, 32>}, {transform_indices = @transform_1, window_bounds = array<i64: 64, 32>}, {pipeline_mode = #tpu.pipeline_mode<synchronous>, transform_indices = @transform_2, window_bounds = array<i64: 32, 128>}, {pipeline_mode = #tpu.pipeline_mode<synchronous>, transform_indices = @transform_3, window_bounds = array<i64: 1, 128>}, {pipeline_mode = #tpu.pipeline_mode<synchronous>, transform_indices = @transform_4, window_bounds = array<i64: 128, 32>}, {pipeline_mode = #tpu.pipeline_mode<synchronous>, transform_indices = @transform_5, window_bounds = array<i64: 1, 32>}, {transform_indices = @transform_6, window_bounds = array<i64: 64, 32>}]} {
    %c0 = arith.constant 0 : index
    %c0_0 = arith.constant 0 : index
    %0 = vector.load %arg1[%c0, %c0_0] : memref<64x32xbf16, #tpu.memory_space<vmem>>, vector<64x32xbf16>
    %1 = arith.extf %0 : vector<64x32xbf16> to vector<64x32xf32>
    %c0_1 = arith.constant 0 : index
    %c0_2 = arith.constant 0 : index
    %2 = vector.load %arg2[%c0_1, %c0_2] : memref<64x32xbf16, #tpu.memory_space<vmem>>, vector<64x32xbf16>
    %3 = arith.extf %2 : vector<64x32xbf16> to vector<64x32xf32>
    %4 = arith.addf %1, %3 : vector<64x32xf32>
    %5 = arith.truncf %4 : vector<64x32xf32> to vector<64x32xbf16>
    %c0_3 = arith.constant 0 : index
    %c0_4 = arith.constant 0 : index
    %6 = vector.load %arg3[%c0_3, %c0_4] : memref<32x128xbf16, #tpu.memory_space<vmem>>, vector<32x128xbf16>
    %cst = arith.constant dense<0.000000e+00> : vector<64x128xf32>
    %7 = tpu.matmul %5, %6, %cst {dimension_numbers = #tpu.dot_dimension_numbers<[1], [0], [0], [1], [0, 0, 1, 1], [], []>} : vector<64x32xbf16>, vector<32x128xbf16>, vector<64x128xf32> -> vector<64x128xf32>
    %c0_5 = arith.constant 0 : index
    %c0_6 = arith.constant 0 : index
    %8 = vector.load %arg4[%c0_5, %c0_6] : memref<1x128xf32, #tpu.memory_space<vmem>>, vector<1x128xf32>
    %9 = vector.broadcast %8 : vector<1x128xf32> to vector<64x128xf32>
    %10 = arith.addf %7, %9 : vector<64x128xf32>
    %cst_7 = arith.constant 5.000000e-01 : f32
    %11 = vector.broadcast %cst_7 : f32 to vector<64x128xf32>
    %12 = arith.mulf %11, %10 : vector<64x128xf32>
    %cst_8 = arith.constant 0.707106769 : f32
    %13 = vector.broadcast %cst_8 : f32 to vector<64x128xf32>
    %14 = arith.mulf %10, %13 : vector<64x128xf32>
    %cst_9 = arith.constant 0.000000e+00 : f32
    %15 = vector.broadcast %cst_9 : f32 to vector<64x128xf32>
    %16 = arith.cmpf oge, %14, %15 : vector<64x128xf32>
    %cst_10 = arith.constant 1.000000e+00 : f32
    %cst_11 = arith.constant -1.000000e+00 : f32
    %17 = vector.broadcast %cst_10 : f32 to vector<64x128xf32>
    %18 = vector.broadcast %cst_11 : f32 to vector<64x128xf32>
    %19 = arith.select %16, %17, %18 : vector<64x128xi1>, vector<64x128xf32>
    %20 = math.absf %14 : vector<64x128xf32>
    %cst_12 = arith.constant 0.327591091 : f32
    %21 = vector.broadcast %cst_12 : f32 to vector<64x128xf32>
    %22 = arith.mulf %21, %20 : vector<64x128xf32>
    %cst_13 = arith.constant 1.000000e+00 : f32
    %23 = vector.broadcast %cst_13 : f32 to vector<64x128xf32>
    %24 = arith.addf %23, %22 : vector<64x128xf32>
    %25 = tpu.reciprocal %24 {approx = true} : vector<64x128xf32> -> vector<64x128xf32>
    %cst_14 = arith.constant 1.06140542 : f32
    %26 = vector.broadcast %cst_14 : f32 to vector<64x128xf32>
    %27 = arith.mulf %26, %25 : vector<64x128xf32>
    %cst_15 = arith.constant -1.45315206 : f32
    %28 = vector.broadcast %cst_15 : f32 to vector<64x128xf32>
    %29 = arith.addf %27, %28 : vector<64x128xf32>
    %30 = arith.mulf %29, %25 : vector<64x128xf32>
    %cst_16 = arith.constant 1.42141378 : f32
    %31 = vector.broadcast %cst_16 : f32 to vector<64x128xf32>
    %32 = arith.addf %30, %31 : vector<64x128xf32>
    %33 = arith.mulf %32, %25 : vector<64x128xf32>
    %cst_17 = arith.constant -0.284496725 : f32
    %34 = vector.broadcast %cst_17 : f32 to vector<64x128xf32>
    %35 = arith.addf %33, %34 : vector<64x128xf32>
    %36 = arith.mulf %35, %25 : vector<64x128xf32>
    %cst_18 = arith.constant 0.254829586 : f32
    %37 = vector.broadcast %cst_18 : f32 to vector<64x128xf32>
    %38 = arith.addf %36, %37 : vector<64x128xf32>
    %39 = arith.mulf %38, %25 : vector<64x128xf32>
    %cst_19 = arith.constant 0.000000e+00 : f32
    %40 = vector.broadcast %cst_19 : f32 to vector<64x128xf32>
    %41 = arith.subf %40, %20 : vector<64x128xf32>
    %42 = arith.mulf %41, %20 : vector<64x128xf32>
    %43 = math.exp %42 : vector<64x128xf32>
    %44 = arith.mulf %39, %43 : vector<64x128xf32>
    %cst_20 = arith.constant 1.000000e+00 : f32
    %45 = vector.broadcast %cst_20 : f32 to vector<64x128xf32>
    %46 = arith.subf %45, %44 : vector<64x128xf32>
    %47 = arith.mulf %19, %46 : vector<64x128xf32>
    %cst_21 = arith.constant 1.000000e+00 : f32
    %48 = vector.broadcast %cst_21 : f32 to vector<64x128xf32>
    %49 = arith.addf %48, %47 : vector<64x128xf32>
    %50 = arith.mulf %12, %49 : vector<64x128xf32>
    %51 = arith.truncf %50 : vector<64x128xf32> to vector<64x128xbf16>
    %c0_22 = arith.constant 0 : index
    %c0_23 = arith.constant 0 : index
    %52 = vector.load %arg5[%c0_22, %c0_23] : memref<128x32xbf16, #tpu.memory_space<vmem>>, vector<128x32xbf16>
    %cst_24 = arith.constant dense<0.000000e+00> : vector<64x32xf32>
    %53 = tpu.matmul %51, %52, %cst_24 {dimension_numbers = #tpu.dot_dimension_numbers<[1], [0], [0], [1], [0, 0, 1, 1], [], []>} : vector<64x128xbf16>, vector<128x32xbf16>, vector<64x32xf32> -> vector<64x32xf32>
    %c0_25 = arith.constant 0 : index
    %c0_26 = arith.constant 0 : index
    %54 = vector.load %arg6[%c0_25, %c0_26] : memref<1x32xf32, #tpu.memory_space<vmem>>, vector<1x32xf32>
    %55 = vector.broadcast %54 : vector<1x32xf32> to vector<64x32xf32>
    %56 = arith.addf %53, %55 : vector<64x32xf32>
    %c0_27 = arith.constant 0 : index
    %c0_28 = arith.constant 0 : index
    %57 = vector.load %arg7[%c0_27, %c0_28] : memref<64x32xf32, #tpu.memory_space<vmem>>, vector<64x32xf32>
    tpu.vector_store %arg7[%c0_27, %c0_28], %56 {strides = array<i32>} : memref<64x32xf32, #tpu.memory_space<vmem>>, vector<64x32xf32>,
    return
  }
  func.func @transform_0(%arg0: i32) -> (i32, i32) {
    %c0_i32 = arith.constant 0 : i32
    %c0_i32_0 = arith.constant 0 : i32
    return %arg0, %c0_i32 : i32, i32
  }
  func.func @transform_1(%arg0: i32) -> (i32, i32) {
    %c0_i32 = arith.constant 0 : i32
    %c0_i32_0 = arith.constant 0 : i32
    return %arg0, %c0_i32 : i32, i32
  }
  func.func @transform_2(%arg0: i32) -> (i32, i32) {
    %c0_i32 = arith.constant 0 : i32
    %c0_i32_0 = arith.constant 0 : i32
    %c0_i32_1 = arith.constant 0 : i32
    return %c0_i32, %c0_i32_0 : i32, i32
  }
  func.func @transform_3(%arg0: i32) -> (i32, i32) {
    %c0_i32 = arith.constant 0 : i32
    %c0_i32_0 = arith.constant 0 : i32
    %c0_i32_1 = arith.constant 0 : i32
    return %c0_i32, %c0_i32_0 : i32, i32
  }
  func.func @transform_4(%arg0: i32) -> (i32, i32) {
    %c0_i32 = arith.constant 0 : i32
    %c0_i32_0 = arith.constant 0 : i32
    %c0_i32_1 = arith.constant 0 : i32
    return %c0_i32, %c0_i32_0 : i32, i32
  }
  func.func @transform_5(%arg0: i32) -> (i32, i32) {
    %c0_i32 = arith.constant 0 : i32
    %c0_i32_0 = arith.constant 0 : i32
    %c0_i32_1 = arith.constant 0 : i32
    return %c0_i32, %c0_i32_0 : i32, i32
  }
  func.func @transform_6(%arg0: i32) -> (i32, i32) {
    %c0_i32 = arith.constant 0 : i32
    %c0_i32_0 = arith.constant 0 : i32
    return %arg0, %c0_i32 : i32, i32
  }
}

</mosaic_0001>

<llo_original>
// kernel: reverse.1
$region0: #{reverse.1}
  #allocation0 [shape = 's32[1]{0}', space=sflag, size = 0x4, scoped, tag = 'scoped memory for reverse.1']
  %s0 = inlined_call_operand.vmem [shape: f32[2,32,16,7], index: 0, kind: input, shape index: {}]
  %s1 = inlined_call_operand.vmem [shape: f32[2,32,16,7], index: 1, kind: output, shape index: {}]
  %s2 = scalar_lea.vmem %s0, 96
  %v3 = vld [vmem:[%s2] sm:$0xff]
  %4 = vst [vmem:[%s1] sm:$0xff] %v3
  %s5 = scalar_lea.vmem %s0, 208
  %v6 = vld [vmem:[%s5] sm:$0xff]
  %s7 = scalar_lea.vmem %s1, 112
  %8 = vst [vmem:[%s7] sm:$0xff] %v6
  %s9 = scalar_lea.vmem %s0, 80
  %v10 = vld [vmem:[%s9] sm:$0xff]
  %s11 = scalar_lea.vmem %s1, 16
  %12 = vst [vmem:[%s11] sm:$0xff] %v10
  %s13 = scalar_lea.vmem %s0, 192
  %v14 = vld [vmem:[%s13] sm:$0xff]
  %s15 = scalar_lea.vmem %s1, 128
  %16 = vst [vmem:[%s15] sm:$0xff] %v14
  %s17 = scalar_lea.vmem %s0, 64
  %v18 = vld [vmem:[%s17] sm:$0xff]
  %s19 = scalar_lea.vmem %s1, 32
  %20 = vst [vmem:[%s19] sm:$0xff] %v18
  %s21 = scalar_lea.vmem %s0, 176
  %v22 = vld [vmem:[%s21] sm:$0xff]
  %s23 = scalar_lea.vmem %s1, 144
  %24 = vst [vmem:[%s23] sm:$0xff] %v22
  %s25 = scalar_lea.vmem %s0, 48
  %v26 = vld [vmem:[%s25] sm:$0xff]
  %s27 = scalar_lea.vmem %s1, 48
  %28 = vst [vmem:[%s27] sm:$0xff] %v26
  %s29 = scalar_lea.vmem %s0, 160
  %v30 = vld [vmem:[%s29] sm:$0xff]
  %s31 = scalar_lea.vmem %s1, 160
  %32 = vst [vmem:[%s31] sm:$0xff] %v30
  %s33 = scalar_lea.vmem %s0, 32
  %v34 = vld [vmem:[%s33] sm:$0xff]
  %s35 = scalar_lea.vmem %s1, 64
  %36 = vst [vmem:[%s35] sm:$0xff] %v34
  %s37 = scalar_lea.vmem %s0, 144
  %v38 = vld [vmem:[%s37] sm:$0xff]
  %s39 = scalar_lea.vmem %s1, 176
  %40 = vst [vmem:[%s39] sm:$0xff] %v38
  %s41 = scalar_lea.vmem %s0, 16
  %v42 = vld [vmem:[%s41] sm:$0xff]
  %s43 = scalar_lea.vmem %s1, 80
  %44 = vst [vmem:[%s43] sm:$0xff] %v42
  %s45 = scalar_lea.vmem %s0, 128
  %v46 = vld [vmem:[%s45] sm:$0xff]
  %s47 = scalar_lea.vmem %s1, 192
  %48 = vst [vmem:[%s47] sm:$0xff] %v46
  %v49 = vld [vmem:[%s0] sm:$0xff]
  %s50 = scalar_lea.vmem %s1, 96
  %51 = vst [vmem:[%s50] sm:$0xff] %v49
  %s52 = scalar_lea.vmem %s0, 112
  %v53 = vld [vmem:[%s52] sm:$0xff]
  %s54 = scalar_lea.vmem %s1, 208
  %55 = vst [vmem:[%s54] sm:$0xff] %v53
  %s56 = scalar_lea.vmem %s0, 104
  %v57 = vld [vmem:[%s56] sm:$0xff]
  %s58 = scalar_lea.vmem %s1, 8
  %59 = vst [vmem:[%s58] sm:$0xff] %v57
  %s60 = scalar_lea.vmem %s0, 216
  %v61 = vld [vmem:[%s60] sm:$0xff]
  %s62 = scalar_lea.vmem %s1, 120
  %63 = vst [vmem:[%s62] sm:$0xff] %v61
  %s64 = scalar_lea.vmem %s0, 88
  %v65 = vld [vmem:[%s64] sm:$0xff]
  %s66 = scalar_lea.vmem %s1, 24
  %67 = vst [vmem:[%s66] sm:$0xff] %v65
  %s68 = scalar_lea.vmem %s0, 200
  %v69 = vld [vmem:[%s68] sm:$0xff]
  %s70 = scalar_lea.vmem %s1, 136
  %71 = vst [vmem:[%s70] sm:$0xff] %v69
  %s72 = scalar_lea.vmem %s0, 72
  %v73 = vld [vmem:[%s72] sm:$0xff]
  %s74 = scalar_lea.vmem %s1, 40
  %75 = vst [vmem:[%s74] sm:$0xff] %v73
  %s76 = scalar_lea.vmem %s0, 184
  %v77 = vld [vmem:[%s76] sm:$0xff]
  %s78 = scalar_lea.vmem %s1, 152
  %79 = vst [vmem:[%s78] sm:$0xff] %v77
  %s80 = scalar_lea.vmem %s0, 56
  %v81 = vld [vmem:[%s80] sm:$0xff]
  %s82 = scalar_lea.vmem %s1, 56
  %83 = vst [vmem:[%s82] sm:$0xff] %v81
  %s84 = scalar_lea.vmem %s0, 168
  %v85 = vld [vmem:[%s84] sm:$0xff]
  %s86 = scalar_lea.vmem %s1, 168
  %87 = vst [vmem:[%s86] sm:$0xff] %v85
  %s88 = scalar_lea.vmem %s0, 40
  %v89 = vld [vmem:[%s88] sm:$0xff]
  %s90 = scalar_lea.vmem %s1, 72
  %91 = vst [vmem:[%s90] sm:$0xff] %v89
  %s92 = scalar_lea.vmem %s0, 152
  %v93 = vld [vmem:[%s92] sm:$0xff]
  %s94 = scalar_lea.vmem %s1, 184
  %95 = vst [vmem:[%s94] sm:$0xff] %v93
  %s96 = scalar_lea.vmem %s0, 24
  %v97 = vld [vmem:[%s96] sm:$0xff]
  %s98 = scalar_lea.vmem %s1, 88
  %99 = vst [vmem:[%s98] sm:$0xff] %v97
  %s100 = scalar_lea.vmem %s0, 136
  %v101 = vld [vmem:[%s100] sm:$0xff]
  %s102 = scalar_lea.vmem %s1, 200
  %103 = vst [vmem:[%s102] sm:$0xff] %v101
  %s104 = scalar_lea.vmem %s0, 8
  %v105 = vld [vmem:[%s104] sm:$0xff]
  %s106 = scalar_lea.vmem %s1, 104
  %107 = vst [vmem:[%s106] sm:$0xff] %v105
  %s108 = scalar_lea.vmem %s0, 120
  %v109 = vld [vmem:[%s108] sm:$0xff]
  %s110 = scalar_lea.vmem %s1, 216
  %111 = vst [vmem:[%s110] sm:$0xff] %v109

// kernel: afno_boundaries_block_forward.2
$region0: #{afno_boundaries_block_forward.2}
  #allocation0 [shape = 'u32[]', space=smem, size = 0x4, offset = 0x4, fixed_abs, tag = 'smem constant byte address 0x4 - core index']
  #allocation1 [shape = 'u32[72,128]{1,0:T(1,128)}', space=vmem, size = 0x9000, scoped, tag = 'internal scratch']
  %s0 = inlined_call_operand.vmem [shape: bf16[320,64], index: 0, kind: input, shape index: {}]
  %s1 = inlined_call_operand.vmem [shape: bf16[64,64], index: 1, kind: input, shape index: {}]
  %s2 = inlined_call_operand.vmem [shape: f32[1,64], index: 2, kind: input, shape index: {}]
  %s3 = inlined_call_operand.vmem [shape: bf16[64,64], index: 3, kind: input, shape index: {}]
  %s4 = inlined_call_operand.vmem [shape: f32[1,64], index: 4, kind: input, shape index: {}]
  %s5 = inlined_call_operand.vmem [shape: bf16[320,64], index: 5, kind: output, shape index: {}]
  %s6 = sld [smem:[#allocation0]]
  $region53: #{afno_boundaries_block_forward.2} parent=0
    _
  %s8 = ssub.s32 1, %s6
  %s9 = scalar_select 0, %s8, %s6
  loop: start=0, step=1, limit=10
  $region2: #{afno_boundaries_block_forward.2} parent=0 // loop_pre_header
    _
  $region3: #{afno_boundaries_block_forward.2} parent=0 // loop_header
    %s11 = sphi 0, %s15
    %p12 = scmp.ge.s32.totalorder %s11, 10
    %s21 = sphi 0, %s23
    %s24 = sphi 0, %s21
    %s25 = sphi 0, %s24
    %s41 = sphi 0, %s25
    %s45 = sphi 0, %s45
    %s47 = sphi 0, %s45
    %s48 = sphi 0, %s47
    %s62 = sphi 0, %s48
    %s66 = sphi 0, %s66
    %s68 = sphi 0, %s66
    %s69 = sphi 0, %s68
    %s83 = sphi 0, %s69
    %s87 = sphi 0, %s87
    %s89 = sphi 0, %s87
    %s90 = sphi 0, %s89
    %s104 = sphi 0, %s90
    %s108 = sphi 0, %s108
    %s110 = sphi 0, %s108
    %s111 = sphi 0, %s110
    %s125 = sphi 0, %s111
    %s131 = sphi 0, %s133
    %s134 = sphi 0, %s131
    %s135 = sphi 0, %s134
    %s151 = sphi 0, %s135
  $region4: #{afno_boundaries_block_forward.2} parent=0 // loop_header_branch
    %14 = sbr.rel (%p12) target = $region8
  $region5: #{afno_boundaries_block_forward.2} parent=0 // loop_body
    %s16 = ssub.s32 %s11, 1
    %s17 = ssub.s32 %s11, 2
    %s18 = sadd.s32 %s11, 1
    %s19 = ssub.s32 %s11, %s18
    %p20 = scmp.eq.s32.totalorder %s19, 0
    %s22 = sadd.s32 %s21, 1
    %s23 = scalar_select %p20, %s21, %s22
    %p26 = pneg %p20
    %p27 = scmp.eq.s32.totalorder %s11, 7
    %p28 = por %p26, %p27
    %p29 = scmp.ne.s32.totalorder %s21, %s24
    %p30 = scmp.eq.s32.totalorder %s11, 0
    %p31 = por %p29, %p30
    %p32 = scmp.ne.s32.totalorder %s21, %s24
    %p33 = scmp.eq.s32.totalorder %s16, 7
    %p34 = por %p32, %p33
    %p35 = scmp.ne.s32.totalorder %s24, %s25
    %p36 = scmp.eq.s32.totalorder %s16, 0
    %p37 = por %p35, %p36
    %p38 = scmp.ne.s32.totalorder %s24, %s25
    %p39 = scmp.eq.s32.totalorder %s17, 7
    %p40 = por %p38, %p39
    %p42 = scmp.ne.s32.totalorder %s25, %s41
    %p43 = scmp.eq.s32.totalorder %s17, 0
    %p44 = por %p42, %p43
    %s46 = sadd.s32 %s45, 1
    %p49 = scmp.eq.s32.totalorder %s11, 7
    %p50 = scmp.ne.s32.totalorder %s45, %s47
    %p51 = scmp.eq.s32.totalorder %s11, 0
    %p52 = por %p50, %p51
    %p53 = scmp.ne.s32.totalorder %s45, %s47
    %p54 = scmp.eq.s32.totalorder %s16, 7
    %p55 = por %p53, %p54
    %p56 = scmp.ne.s32.totalorder %s47, %s48
    %p57 = scmp.eq.s32.totalorder %s16, 0
    %p58 = por %p56, %p57
    %p59 = scmp.ne.s32.totalorder %s47, %s48
    %p60 = scmp.eq.s32.totalorder %s17, 7
    %p61 = por %p59, %p60
    %p63 = scmp.ne.s32.totalorder %s48, %s62
    %p64 = scmp.eq.s32.totalorder %s17, 0
    %p65 = por %p63, %p64
    %s67 = sadd.s32 %s66, 1
    %p70 = scmp.eq.s32.totalorder %s11, 7
    %p71 = scmp.ne.s32.totalorder %s66, %s68
    %p72 = scmp.eq.s32.totalorder %s11, 0
    %p73 = por %p71, %p72
    %p74 = scmp.ne.s32.totalorder %s66, %s68
    %p75 = scmp.eq.s32.totalorder %s16, 7
    %p76 = por %p74, %p75
    %p77 = scmp.ne.s32.totalorder %s68, %s69
    %p78 = scmp.eq.s32.totalorder %s16, 0
    %p79 = por %p77, %p78
    %p80 = scmp.ne.s32.totalorder %s68, %s69
    %p81 = scmp.eq.s32.totalorder %s17, 7
    %p82 = por %p80, %p81
    %p84 = scmp.ne.s32.totalorder %s69, %s83
    %p85 = scmp.eq.s32.totalorder %s17, 0
    %p86 = por %p84, %p85
    %s88 = sadd.s32 %s87, 1
    %p91 = scmp.eq.s32.totalorder %s11, 7
    %p92 = scmp.ne.s32.totalorder %s87, %s89
    %p93 = scmp.eq.s32.totalorder %s11, 0
    %p94 = por %p92, %p93
    %p95 = scmp.ne.s32.totalorder %s87, %s89
    %p96 = scmp.eq.s32.totalorder %s16, 7
    %p97 = por %p95, %p96
    %p98 = scmp.ne.s32.totalorder %s89, %s90
    %p99 = scmp.eq.s32.totalorder %s16, 0
    %p100 = por %p98, %p99
    %p101 = scmp.ne.s32.totalorder %s89, %s90
    %p102 = scmp.eq.s32.totalorder %s17, 7
    %p103 = por %p101, %p102
    %p105 = scmp.ne.s32.totalorder %s90, %s104
    %p106 = scmp.eq.s32.totalorder %s17, 0
    %p107 = por %p105, %p106
    %s109 = sadd.s32 %s108, 1
    %p112 = scmp.eq.s32.totalorder %s11, 7
    %p113 = scmp.ne.s32.totalorder %s108, %s110
    %p114 = scmp.eq.s32.totalorder %s11, 0
    %p115 = por %p113, %p114
    %p116 = scmp.ne.s32.totalorder %s108, %s110
    %p117 = scmp.eq.s32.totalorder %s16, 7
    %p118 = por %p116, %p117
    %p119 = scmp.ne.s32.totalorder %s110, %s111
    %p120 = scmp.eq.s32.totalorder %s16, 0
    %p121 = por %p119, %p120
    %p122 = scmp.ne.s32.totalorder %s110, %s111
    %p123 = scmp.eq.s32.totalorder %s17, 7
    %p124 = por %p122, %p123
    %p126 = scmp.ne.s32.totalorder %s111, %s125
    %p127 = scmp.eq.s32.totalorder %s17, 0
    %p128 = por %p126, %p127
    %s129 = ssub.s32 %s11, %s18
    %p130 = scmp.eq.s32.totalorder %s129, 0
    %s132 = sadd.s32 %s131, 1
    %s133 = scalar_select %p130, %s131, %s132
    %p136 = pneg %p130
    %p137 = scmp.eq.s32.totalorder %s11, 7
    %p138 = por %p136, %p137
    %p139 = scmp.ne.s32.totalorder %s131, %s134
    %p140 = scmp.eq.s32.totalorder %s11, 0
    %p141 = por %p139, %p140
    %p142 = scmp.ne.s32.totalorder %s131, %s134
    %p143 = scmp.eq.s32.totalorder %s16, 7
    %p144 = por %p142, %p143
    %p145 = scmp.ne.s32.totalorder %s134, %s135
    %p146 = scmp.eq.s32.totalorder %s16, 0
    %p147 = por %p145, %p146
    %p148 = scmp.ne.s32.totalorder %s134, %s135
    %p149 = scmp.eq.s32.totalorder %s17, 7
    %p150 = por %p148, %p149
    %p152 = scmp.ne.s32.totalorder %s135, %s151
    %p153 = scmp.eq.s32.totalorder %s17, 0
    %p154 = por %p152, %p153
    %p155 = scmp.le.s32.totalorder 1, %s11
    %p156 = scmp.lt.s32.totalorder %s11, 9
    %p157 = pnand %p155, %p156
    %p158 = pneg %p157
    // Predicated region
    $region9: #{afno_boundaries_block_forward.2} parent=5 // pred_check
      _
    $region10: #{afno_boundaries_block_forward.2} parent=5 // pred_check_branch
      %160 = sbr.rel (%p157) target = $region12
    $region11: #{afno_boundaries_block_forward.2} parent=5 // pred_region
      %s161 = ssub.s32 %s11, 1
      // Predicated region
      $region13: #{afno_boundaries_block_forward.2} parent=11 // pred_check
        %p162 = pneg %p58
      $region14: #{afno_boundaries_block_forward.2} parent=11 // pred_check_branch
        %164 = sbr.rel (%p162) target = $region16
      $region15: #{afno_boundaries_block_forward.2} parent=11 // pred_region
        _
      $region16: #{afno_boundaries_block_forward.2} parent=11 // pred_fallthru
        _
      // Predicated region
      $region17: #{afno_boundaries_block_forward.2} parent=11 // pred_check
        %p165 = pneg %p79
      $region18: #{afno_boundaries_block_forward.2} parent=11 // pred_check_branch
        %167 = sbr.rel (%p165) target = $region20
      $region19: #{afno_boundaries_block_forward.2} parent=11 // pred_region
        _
      $region20: #{afno_boundaries_block_forward.2} parent=11 // pred_fallthru
        _
      // Predicated region
      $region21: #{afno_boundaries_block_forward.2} parent=11 // pred_check
        %p168 = pneg %p100
      $region22: #{afno_boundaries_block_forward.2} parent=11 // pred_check_branch
        %170 = sbr.rel (%p168) target = $region24
      $region23: #{afno_boundaries_block_forward.2} parent=11 // pred_region
        _
      $region24: #{afno_boundaries_block_forward.2} parent=11 // pred_fallthru
        _
      // Predicated region
      $region25: #{afno_boundaries_block_forward.2} parent=11 // pred_check
        %p171 = pneg %p121
      $region26: #{afno_boundaries_block_forward.2} parent=11 // pred_check_branch
        %173 = sbr.rel (%p171) target = $region28
      $region27: #{afno_boundaries_block_forward.2} parent=11 // pred_region
        _
      $region28: #{afno_boundaries_block_forward.2} parent=11 // pred_fallthru
        _
    $region12: #{afno_boundaries_block_forward.2} parent=5 // pred_fallthru
      _
    %p174 = scmp.lt.s32.totalorder %s11, 8
    // Predicated region
    $region29: #{afno_boundaries_block_forward.2} parent=5 // pred_check
      %p175 = pneg %p174
    $region30: #{afno_boundaries_block_forward.2} parent=5 // pred_check_branch
      %177 = sbr.rel (%p175) target = $region32
    $region31: #{afno_boundaries_block_forward.2} parent=5 // pred_region
      // Predicated region
      $region33: #{afno_boundaries_block_forward.2} parent=31 // pred_check
        %p178 = pneg %p31
      $region34: #{afno_boundaries_block_forward.2} parent=31 // pred_check_branch
        %180 = sbr.rel (%p178) target = $region36
      $region35: #{afno_boundaries_block_forward.2} parent=31 // pred_region
        %s181 = smul.u32 5, %s11
        %p182 = scmp.lt.s32.totalorder %s181, 39
        %s183 = scalar_select %p182, %s181, 39
        %s184 = smul.addr %s183, 4
        %s185 = scalar_lea.vmem %s0, %s184
        %s186 = smul.u32 5, %s11
      $region36: #{afno_boundaries_block_forward.2} parent=31 // pred_fallthru
        _
    $region32: #{afno_boundaries_block_forward.2} parent=5 // pred_fallthru
      _
    %p187 = scmp.le.s32.totalorder 1, %s11
    %p188 = scmp.lt.s32.totalorder %s11, 9
    %p189 = pnand %p187, %p188
    %p190 = pneg %p189
    // Predicated region
    $region37: #{afno_boundaries_block_forward.2} parent=5 // pred_check
      _
    $region38: #{afno_boundaries_block_forward.2} parent=5 // pred_check_branch
      %192 = sbr.rel (%p189) target = $region40
    $region39: #{afno_boundaries_block_forward.2} parent=5 // pred_region
      %s193 = ssub.s32 %s11, 1
      %s194 = smul.u32 5, %s16
      %p195 = scmp.lt.s32.totalorder %s194, 39
      %s196 = scalar_select %p195, %s194, 39
      %s197 = smul.addr %s196, 4
      %s198 = scalar_lea.vmem %s0, %s197
      %p199 = pneg %p37
      %p200 = pneg %p34
      %p201 = pneg %p58
      %p202 = pneg %p55
      %p203 = pneg %p79
      %p204 = pneg %p76
      %p205 = pneg %p100
      %p206 = pneg %p97
      %p207 = pneg %p121
      %p208 = pneg %p118
      %p209 = pneg %p147
      %p210 = pneg %p144
      %s211 = smul.u32 5, %s16
      %p212 = scmp.lt.s32.totalorder %s211, 39
      %s213 = scalar_select %p212, %s211, 39
      %s214 = smul.addr %s213, 4
      %s215 = scalar_lea.vmem %s5, %s214
      %s216 = smul.u32 5, %s16
      %p217 = scmp.lt.s32.totalorder %s216, 39
      %s218 = scalar_select %p217, %s216, 39
      %s219 = smul.addr %s218, 4
      %s220 = scalar_lea.vmem %s0, %s219
      %s221 = smul.u32 5, %s16
      %s222 = smul.u32 5, %s16
      %p223 = scmp.lt.s32.totalorder %s222, 39
      %s224 = scalar_select %p223, %s222, 39
      %s225 = smul.addr %s224, 4
      %s226 = scalar_lea.vmem %s5, %s225
      %s227 = smul.u32 5, %s16
      %v229 = vld [vmem:[%s220] sm:$0xf]
      %v230 = vld [vmem:[%s220 + $0x4] sm:$0xf]
      %v231 = vld [vmem:[%s220 + $0x8] sm:$0xf]
      %v232 = vld [vmem:[%s220 + $0xc] sm:$0xf]
      %v233 = vld [vmem:[%s220 + $0x10] sm:$0xf]
      %v234 = vld [vmem:[%s1] sm:$0xf]
      %v235 = vld [vmem:[%s1 + $0x4] sm:$0xf]
      %v236 = vld [vmem:[%s1 + $0x8] sm:$0xf]
      %v237 = vld [vmem:[%s1 + $0xc] sm:$0xf]
      %v238 = vld [vmem:[%s1 + $0x10] sm:$0xf]
      %v239 = vld [vmem:[%s1 + $0x14] sm:$0xf]
      %v240 = vld [vmem:[%s1 + $0x18] sm:$0xf]
      %v241 = vld [vmem:[%s1 + $0x1c] sm:$0xf]
      %v242 = vld [vmem:[%s2] sm:$0x1]
      %v244 = vperm.slane %v242, 0
      %v251 = vunpack.c.l.b16 %v229
      %v252 = vunpack.c.l.b16 %v230
      %v253 = vunpack.c.l.b16 %v231
      %v254 = vunpack.c.l.b16 %v232
      %v255 = vunpack.c.l.b16 %v233
      %v256 = vpack.c.b16 %v252, %v251
      %v257 = vpack.c.b16 %v254, %v253
      %v258 = vpack.c.b16 %v255, %v255
      %v267 = vunpack.c.l.b16 %v234
      %v268 = vunpack.c.l.b16 %v235
      %v269 = vunpack.c.l.b16 %v236
      %v270 = vunpack.c.l.b16 %v237
      %v271 = vunpack.c.l.b16 %v238
      %v272 = vunpack.c.l.b16 %v239
      %v273 = vunpack.c.l.b16 %v240
      %v274 = vunpack.c.l.b16 %v241
      %v275 = vpack.c.b16 %v268, %v267
      %v276 = vpack.c.b16 %v270, %v269
      %v277 = vpack.c.b16 %v272, %v271
      %v278 = vpack.c.b16 %v274, %v273
      %vm283 = vcmask 523264
      %v285 = vsel %vm283, %v256, 0
      %v288 = vsel %vm283, %v257, 0
      %v291 = vsel %vm283, %v258, 0
      %293 = vmatpush.bf16.msra.mxu0 0
      %294 = vmatpush.bf16.msra.mxu0 0
      %295 = vmatpush.bf16.msra.mxu0 0
      %296 = vmatpush.bf16.msra.mxu0 0
      %297 = vmatpush.bf16.msra.mxu0 %v278
      %298 = vmatpush.bf16.msra.mxu0 %v277
      %299 = vmatpush.bf16.msra.mxu0 %v276
      %300 = vmatpush.bf16.msra.mxu0 %v275
      %301 = vmatmul.bf16.gmra.mxu0 %v285
      %v302 = vpop.f32.mrf.mxu0
      %v303 = vadd.f32 %v244, %v302
      %v304 = vpop.f32.mrf.mxu0
      %v305 = vadd.f32 %v244, %v304
      %306 = vmatmul.bf16.gmra.mxu0 %v288
      %v307 = vpop.f32.mrf.mxu0
      %v308 = vadd.f32 %v244, %v307
      %v309 = vpop.f32.mrf.mxu0
      %v310 = vadd.f32 %v244, %v309
      %311 = vmatmul.bf16.gmra.mxu0 %v291
      %v312 = vpop.f32.mrf.mxu0
      %v313 = vadd.f32 %v244, %v312
      %v314 = vpop.f32.mrf.mxu0
      %315 = vdwg.mxu0
      %v316 = vmul.f32 %v303, 0.5
      %v317 = vmul.f32 %v305, 0.5
      %v318 = vmul.f32 %v308, 0.5
      %v319 = vmul.f32 %v310, 0.5
      %v320 = vmul.f32 %v313, 0.5
      %v321 = vmul.f32 %v303, 0.70710677
      %v322 = vmul.f32 %v305, 0.70710677
      %v323 = vmul.f32 %v308, 0.70710677
      %v324 = vmul.f32 %v310, 0.70710677
      %v325 = vmul.f32 %v313, 0.70710677
      %vm326 = vcmp.ge.f32.partialorder %v321, 0.0
      %vm327 = vcmp.ge.f32.partialorder %v322, 0.0
      %vm328 = vcmp.ge.f32.partialorder %v323, 0.0
      %vm329 = vcmp.ge.f32.partialorder %v324, 0.0
      %vm330 = vcmp.ge.f32.partialorder %v325, 0.0
      %v331 = vsel %vm326, 1.0, -1.0
      %v332 = vsel %vm327, 1.0, -1.0
      %v333 = vsel %vm328, 1.0, -1.0
      %v334 = vsel %vm329, 1.0, -1.0
      %v335 = vsel %vm330, 1.0, -1.0
      %v336 = vand.u32 2147483647, %v321
      %v337 = vand.u32 2147483647, %v322
      %v338 = vand.u32 2147483647, %v323
      %v339 = vand.u32 2147483647, %v324
      %v340 = vand.u32 2147483647, %v325
      %v341 = vmul.f32 %v336, 0.3275911
      %v342 = vmul.f32 %v337, 0.3275911
      %v343 = vmul.f32 %v338, 0.3275911
      %v344 = vmul.f32 %v339, 0.3275911
      %v345 = vmul.f32 %v340, 0.3275911
      %v346 = vadd.f32 %v341, 1.0
      %v347 = vadd.f32 %v342, 1.0
      %v348 = vadd.f32 %v343, 1.0
      %v349 = vadd.f32 %v344, 1.0
      %v350 = vadd.f32 %v345, 1.0
      %v351 = vrcp.pop %v346
      %v352 = vrcp.pop %v347
      %v353 = vrcp.pop %v348
      %v354 = vrcp.pop %v349
      %v355 = vrcp.pop %v350
      %v356 = vmul.f32 %v351, 1.0614054
      %v357 = vmul.f32 %v352, 1.0614054
      %v358 = vmul.f32 %v353, 1.0614054
      %v359 = vmul.f32 %v354, 1.0614054
      %v360 = vmul.f32 %v355, 1.0614054
      %v361 = vadd.f32 %v356, -1.4531521
      %v362 = vadd.f32 %v357, -1.4531521
      %v363 = vadd.f32 %v358, -1.4531521
      %v364 = vadd.f32 %v359, -1.4531521
      %v365 = vadd.f32 %v360, -1.4531521
      %v366 = vmul.f32 %v361, %v351
      %v367 = vmul.f32 %v362, %v352
      %v368 = vmul.f32 %v363, %v353
      %v369 = vmul.f32 %v364, %v354
      %v370 = vmul.f32 %v365, %v355
      %v371 = vadd.f32 %v366, 1.4214138
      %v372 = vadd.f32 %v367, 1.4214138
      %v373 = vadd.f32 %v368, 1.4214138
      %v374 = vadd.f32 %v369, 1.4214138
      %v375 = vadd.f32 %v370, 1.4214138
      %v376 = vmul.f32 %v371, %v351
      %v377 = vmul.f32 %v372, %v352
      %v378 = vmul.f32 %v373, %v353
      %v379 = vmul.f32 %v374, %v354
      %v380 = vmul.f32 %v375, %v355
      %v381 = vadd.f32 %v376, -0.28449672
      %v382 = vadd.f32 %v377, -0.28449672
      %v383 = vadd.f32 %v378, -0.28449672
      %v384 = vadd.f32 %v379, -0.28449672
      %v385 = vadd.f32 %v380, -0.28449672
      %v386 = vmul.f32 %v381, %v351
      %v387 = vmul.f32 %v382, %v352
      %v388 = vmul.f32 %v383, %v353
      %v389 = vmul.f32 %v384, %v354
      %v390 = vmul.f32 %v385, %v355
      %v391 = vadd.f32 %v386, 0.2548296
      %v392 = vadd.f32 %v387, 0.2548296
      %v393 = vadd.f32 %v388, 0.2548296
      %v394 = vadd.f32 %v389, 0.2548296
      %v395 = vadd.f32 %v390, 0.2548296
      %v396 = vmul.f32 %v391, %v351
      %v397 = vmul.f32 %v392, %v352
      %v398 = vmul.f32 %v393, %v353
      %v399 = vmul.f32 %v394, %v354
      %v400 = vmul.f32 %v395, %v355
      %v401 = vsub.f32 0.0, %v336
      %v402 = vsub.f32 0.0, %v337
      %v403 = vsub.f32 0.0, %v338
      %v404 = vsub.f32 0.0, %v339
      %v405 = vsub.f32 0.0, %v340
      %v406 = vmul.f32 %v401, %v336
      %v407 = vmul.f32 %v402, %v337
      %v408 = vmul.f32 %v403, %v338
      %v409 = vmul.f32 %v404, %v339
      %v410 = vmul.f32 %v405, %v340
      %v411 = vmul.f32 %v406, 1.442695
      %v412 = vpow.pop %v411
      %v413 = vmul.f32 %v407, 1.442695
      %v414 = vpow.pop %v413
      %v415 = vmul.f32 %v408, 1.442695
      %v416 = vpow.pop %v415
      %v417 = vmul.f32 %v409, 1.442695
      %v418 = vpow.pop %v417
      %v419 = vmul.f32 %v410, 1.442695
      %v420 = vpow.pop %v419
      %v421 = vmul.f32 %v396, %v412
      %v422 = vmul.f32 %v397, %v414
      %v423 = vmul.f32 %v398, %v416
      %v424 = vmul.f32 %v399, %v418
      %v425 = vmul.f32 %v400, %v420
      %v426 = vsub.f32 1.0, %v421
      %v427 = vsub.f32 1.0, %v422
      %v428 = vsub.f32 1.0, %v423
      %v429 = vsub.f32 1.0, %v424
      %v430 = vsub.f32 1.0, %v425
      %v431 = vmul.f32 %v331, %v426
      %v432 = vmul.f32 %v332, %v427
      %v433 = vmul.f32 %v333, %v428
      %v434 = vmul.f32 %v334, %v429
      %v435 = vmul.f32 %v335, %v430
      %v436 = vadd.f32 %v431, 1.0
      %v437 = vadd.f32 %v432, 1.0
      %v438 = vadd.f32 %v433, 1.0
      %v439 = vadd.f32 %v434, 1.0
      %v440 = vadd.f32 %v435, 1.0
      %v441 = vmul.f32 %v316, %v436
      %v442 = vmul.f32 %v317, %v437
      %v443 = vmul.f32 %v318, %v438
      %v444 = vmul.f32 %v319, %v439
      %v445 = vmul.f32 %v320, %v440
      %v446 = vpack.c.bf16 %v442, %v441
      %v447 = vpack.c.bf16 %v444, %v443
      %v448 = vpack.c.bf16 %v445, %v445
      %v449 = vld [vmem:[%s3] sm:$0xf]
      %v450 = vld [vmem:[%s3 + $0x4] sm:$0xf]
      %v451 = vld [vmem:[%s3 + $0x8] sm:$0xf]
      %v452 = vld [vmem:[%s3 + $0xc] sm:$0xf]
      %v453 = vld [vmem:[%s3 + $0x10] sm:$0xf]
      %v454 = vld [vmem:[%s3 + $0x14] sm:$0xf]
      %v455 = vld [vmem:[%s3 + $0x18] sm:$0xf]
      %v456 = vld [vmem:[%s3 + $0x1c] sm:$0xf]
      %v457 = vld [vmem:[%s4] sm:$0x1]
      %v459 = vperm.slane %v457, 0
      %v469 = vunpack.c.l.b16 %v449
      %v470 = vunpack.c.l.b16 %v450
      %v471 = vunpack.c.l.b16 %v451
      %v472 = vunpack.c.l.b16 %v452
      %v473 = vunpack.c.l.b16 %v453
      %v474 = vunpack.c.l.b16 %v454
      %v475 = vunpack.c.l.b16 %v455
      %v476 = vunpack.c.l.b16 %v456
      %v477 = vpack.c.b16 %v470, %v469
      %v478 = vpack.c.b16 %v472, %v471
      %v479 = vpack.c.b16 %v474, %v473
      %v480 = vpack.c.b16 %v476, %v475
      %v486 = vsel %vm283, %v446, 0
      %v489 = vsel %vm283, %v447, 0
      %v492 = vsel %vm283, %v448, 0
      %494 = vmatpush.bf16.msra.mxu0 0
      %495 = vmatpush.bf16.msra.mxu0 0
      %496 = vmatpush.bf16.msra.mxu0 0
      %497 = vmatpush.bf16.msra.mxu0 0
      %498 = vmatpush.bf16.msra.mxu0 %v480
      %499 = vmatpush.bf16.msra.mxu0 %v479
      %500 = vmatpush.bf16.msra.mxu0 %v478
      %501 = vmatpush.bf16.msra.mxu0 %v477
      %502 = vmatmul.bf16.gmra.mxu0 %v486
      %v503 = vpop.f32.mrf.mxu0
      %v504 = vadd.f32 %v459, %v503
      %v505 = vpop.f32.mrf.mxu0
      %v506 = vadd.f32 %v459, %v505
      %507 = vmatmul.bf16.gmra.mxu0 %v489
      %v508 = vpop.f32.mrf.mxu0
      %v509 = vadd.f32 %v459, %v508
      %v510 = vpop.f32.mrf.mxu0
      %v511 = vadd.f32 %v459, %v510
      %512 = vmatmul.bf16.gmra.mxu0 %v492
      %v513 = vpop.f32.mrf.mxu0
      %v514 = vadd.f32 %v459, %v513
      %v515 = vpop.f32.mrf.mxu0
      %516 = vdwg.mxu0
      %vm517 = vcmp.gt.f32.partialorder %v504, 0.01
      %vm518 = vcmp.gt.f32.partialorder %v506, 0.01
      %vm519 = vcmp.gt.f32.partialorder %v509, 0.01
      %vm520 = vcmp.gt.f32.partialorder %v511, 0.01
      %vm521 = vcmp.gt.f32.partialorder %v514, 0.01
      %v522 = vsub.f32 %v504, 0.01
      %v523 = vsub.f32 %v506, 0.01
      %v524 = vsub.f32 %v509, 0.01
      %v525 = vsub.f32 %v511, 0.01
      %v526 = vsub.f32 %v514, 0.01
      %vm527 = vcmp.lt.f32.partialorder %v504, -0.01
      %vm528 = vcmp.lt.f32.partialorder %v506, -0.01
      %vm529 = vcmp.lt.f32.partialorder %v509, -0.01
      %vm530 = vcmp.lt.f32.partialorder %v511, -0.01
      %vm531 = vcmp.lt.f32.partialorder %v514, -0.01
      %v532 = vadd.f32 %v504, 0.01
      %v533 = vadd.f32 %v506, 0.01
      %v534 = vadd.f32 %v509, 0.01
      %v535 = vadd.f32 %v511, 0.01
      %v536 = vadd.f32 %v514, 0.01
      %v537 = vsel %vm527, %v532, 0.0
      %v538 = vsel %vm528, %v533, 0.0
      %v539 = vsel %vm529, %v534, 0.0
      %v540 = vsel %vm530, %v535, 0.0
      %v541 = vsel %vm531, %v536, 0.0
      %v542 = vsel %vm517, %v522, %v537
      %v543 = vsel %vm518, %v523, %v538
      %v544 = vsel %vm519, %v524, %v539
      %v545 = vsel %vm520, %v525, %v540
      %v546 = vsel %vm521, %v526, %v541
      %v547 = vpack.c.bf16 %v542, %v542
      %v548 = vpack.c.bf16 %v543, %v543
      %v549 = vpack.c.bf16 %v544, %v544
      %v550 = vpack.c.bf16 %v545, %v545
      %v551 = vpack.c.bf16 %v546, %v546
      %vm552 = vcmask 519168
      %553 = vst.msk [vmem:[%s226] sm:$0xf] %vm552, %v547
      %554 = vst.msk [vmem:[%s226 + $0x4] sm:$0xf] %vm552, %v548
      %555 = vst.msk [vmem:[%s226 + $0x8] sm:$0xf] %vm552, %v549
      %556 = vst.msk [vmem:[%s226 + $0xc] sm:$0xf] %vm552, %v550
      %557 = vst.msk [vmem:[%s226 + $0x10] sm:$0xf] %vm552, %v551
      %s558 = smul.u32 5, %s16
      %p559 = scmp.lt.s32.totalorder %s558, 39
      %s560 = scalar_select %p559, %s558, 39
      %s561 = smul.addr %s560, 4
      %s562 = scalar_lea.vmem %s5, %s561
      // Predicated region
      $region41: #{afno_boundaries_block_forward.2} parent=39 // pred_check
        %p563 = pneg %p144
      $region42: #{afno_boundaries_block_forward.2} parent=39 // pred_check_branch
        %565 = sbr.rel (%p563) target = $region44
      $region43: #{afno_boundaries_block_forward.2} parent=39 // pred_region
        %s566 = smul.u32 5, %s16
      $region44: #{afno_boundaries_block_forward.2} parent=39 // pred_fallthru
        _
    $region40: #{afno_boundaries_block_forward.2} parent=5 // pred_fallthru
      _
    %p567 = scmp.le.s32.totalorder 2, %s11
    // Predicated region
    $region45: #{afno_boundaries_block_forward.2} parent=5 // pred_check
      %p568 = pneg %p567
    $region46: #{afno_boundaries_block_forward.2} parent=5 // pred_check_branch
      %570 = sbr.rel (%p568) target = $region48
    $region47: #{afno_boundaries_block_forward.2} parent=5 // pred_region
      %s571 = ssub.s32 %s11, 2
      // Predicated region
      $region49: #{afno_boundaries_block_forward.2} parent=47 // pred_check
        %p572 = pneg %p150
      $region50: #{afno_boundaries_block_forward.2} parent=47 // pred_check_branch
        %574 = sbr.rel (%p572) target = $region52
      $region51: #{afno_boundaries_block_forward.2} parent=47 // pred_region
        %s575 = smul.u32 5, %s17
        %p576 = scmp.lt.s32.totalorder %s575, 39
        %s577 = scalar_select %p576, %s575, 39
        %s578 = smul.addr %s577, 4
        %s579 = scalar_lea.vmem %s5, %s578
      $region52: #{afno_boundaries_block_forward.2} parent=47 // pred_fallthru
        _
    $region48: #{afno_boundaries_block_forward.2} parent=5 // pred_fallthru
      _
  $region6: #{afno_boundaries_block_forward.2} parent=0 // loop_footer
    %s15 = sadd.s32 1, %s11
  $region7: #{afno_boundaries_block_forward.2} parent=0 // loop_footer_branch
    %10 = sbr.rel target = $region3
  $region8: #{afno_boundaries_block_forward.2} parent=0 // loop_exit
    _

// kernel: afno_boundaries_block_forward.3
$region0: #{afno_boundaries_block_forward.3}
  #allocation0 [shape = 'u32[]', space=smem, size = 0x4, offset = 0x4, fixed_abs, tag = 'smem constant byte address 0x4 - core index']
  #allocation1 [shape = 'u32[72,128]{1,0:T(1,128)}', space=vmem, size = 0x9000, scoped, tag = 'internal scratch']
  %s0 = inlined_call_operand.vmem [shape: bf16[512,32], index: 0, kind: input, shape index: {}]
  %s1 = inlined_call_operand.vmem [shape: bf16[512,32], index: 1, kind: input, shape index: {}]
  %s2 = inlined_call_operand.vmem [shape: bf16[32,128], index: 2, kind: input, shape index: {}]
  %s3 = inlined_call_operand.vmem [shape: f32[1,128], index: 3, kind: input, shape index: {}]
  %s4 = inlined_call_operand.vmem [shape: bf16[128,32], index: 4, kind: input, shape index: {}]
  %s5 = inlined_call_operand.vmem [shape: f32[1,32], index: 5, kind: input, shape index: {}]
  %s6 = inlined_call_operand.hbm [shape: f32[512,32], index: 6, kind: output, shape index: {}]
  %s7 = sld [smem:[#allocation0]]
  $region57: #{afno_boundaries_block_forward.3} parent=0
    _
  %s9 = ssub.s32 1, %s7
  %s10 = scalar_select 0, %s9, %s7
  $region1: #{afno_boundaries_block_forward.3} parent=0
    #allocation2 [shape = 'u8[65536]{0}', space=vmem, size = 0x10000, scoped, tag = 'output window, operand 0']
    #allocation3 [shape = 's32[2]{0}', space=sflag, size = 0x8, scoped, tag = 'scoped memory for afno_boundaries_block_forward.3']
    %11 = vsyncpa [#allocation3], 0
    %s12 = scalar_lea.sflag [#allocation3], 1
    %13 = vsyncpa %s12, 0
    loop: start=0, step=1, limit=10
    $region2: #{afno_boundaries_block_forward.3} parent=1 // loop_pre_header
      _
    $region3: #{afno_boundaries_block_forward.3} parent=1 // loop_header
      %s15 = sphi 0, %s19
      %p16 = scmp.ge.s32.totalorder %s15, 10
      %s25 = sphi 0, %s27
      %s28 = sphi 0, %s25
      %s29 = sphi 0, %s28
      %s45 = sphi 0, %s29
      %s51 = sphi 0, %s53
      %s54 = sphi 0, %s51
      %s55 = sphi 0, %s54
      %s71 = sphi 0, %s55
      %s75 = sphi 0, %s75
      %s77 = sphi 0, %s75
      %s78 = sphi 0, %s77
      %s92 = sphi 0, %s78
      %s96 = sphi 0, %s96
      %s98 = sphi 0, %s96
      %s99 = sphi 0, %s98
      %s113 = sphi 0, %s99
      %s117 = sphi 0, %s117
      %s119 = sphi 0, %s117
      %s120 = sphi 0, %s119
      %s134 = sphi 0, %s120
      %s138 = sphi 0, %s138
      %s140 = sphi 0, %s138
      %s141 = sphi 0, %s140
      %s155 = sphi 0, %s141
      %s161 = sphi 0, %s163
      %s164 = sphi 0, %s161
      %s165 = sphi 0, %s164
      %s181 = sphi 0, %s165
    $region4: #{afno_boundaries_block_forward.3} parent=1 // loop_header_branch
      %18 = sbr.rel (%p16) target = $region8
    $region5: #{afno_boundaries_block_forward.3} parent=1 // loop_body
      %s20 = ssub.s32 %s15, 1
      %s21 = ssub.s32 %s15, 2
      %s22 = sadd.s32 %s15, 1
      %s23 = ssub.s32 %s15, %s22
      %p24 = scmp.eq.s32.totalorder %s23, 0
      %s26 = sadd.s32 %s25, 1
      %s27 = scalar_select %p24, %s25, %s26
      %p30 = pneg %p24
      %p31 = scmp.eq.s32.totalorder %s15, 7
      %p32 = por %p30, %p31
      %p33 = scmp.ne.s32.totalorder %s25, %s28
      %p34 = scmp.eq.s32.totalorder %s15, 0
      %p35 = por %p33, %p34
      %p36 = scmp.ne.s32.totalorder %s25, %s28
      %p37 = scmp.eq.s32.totalorder %s20, 7
      %p38 = por %p36, %p37
      %p39 = scmp.ne.s32.totalorder %s28, %s29
      %p40 = scmp.eq.s32.totalorder %s20, 0
      %p41 = por %p39, %p40
      %p42 = scmp.ne.s32.totalorder %s28, %s29
      %p43 = scmp.eq.s32.totalorder %s21, 7
      %p44 = por %p42, %p43
      %p46 = scmp.ne.s32.totalorder %s29, %s45
      %p47 = scmp.eq.s32.totalorder %s21, 0
      %p48 = por %p46, %p47
      %s49 = ssub.s32 %s15, %s22
      %p50 = scmp.eq.s32.totalorder %s49, 0
      %s52 = sadd.s32 %s51, 1
      %s53 = scalar_select %p50, %s51, %s52
      %p56 = pneg %p50
      %p57 = scmp.eq.s32.totalorder %s15, 7
      %p58 = por %p56, %p57
      %p59 = scmp.ne.s32.totalorder %s51, %s54
      %p60 = scmp.eq.s32.totalorder %s15, 0
      %p61 = por %p59, %p60
      %p62 = scmp.ne.s32.totalorder %s51, %s54
      %p63 = scmp.eq.s32.totalorder %s20, 7
      %p64 = por %p62, %p63
      %p65 = scmp.ne.s32.totalorder %s54, %s55
      %p66 = scmp.eq.s32.totalorder %s20, 0
      %p67 = por %p65, %p66
      %p68 = scmp.ne.s32.totalorder %s54, %s55
      %p69 = scmp.eq.s32.totalorder %s21, 7
      %p70 = por %p68, %p69
      %p72 = scmp.ne.s32.totalorder %s55, %s71
      %p73 = scmp.eq.s32.totalorder %s21, 0
      %p74 = por %p72, %p73
      %s76 = sadd.s32 %s75, 1
      %p79 = scmp.eq.s32.totalorder %s15, 7
      %p80 = scmp.ne.s32.totalorder %s75, %s77
      %p81 = scmp.eq.s32.totalorder %s15, 0
      %p82 = por %p80, %p81
      %p83 = scmp.ne.s32.totalorder %s75, %s77
      %p84 = scmp.eq.s32.totalorder %s20, 7
      %p85 = por %p83, %p84
      %p86 = scmp.ne.s32.totalorder %s77, %s78
      %p87 = scmp.eq.s32.totalorder %s20, 0
      %p88 = por %p86, %p87
      %p89 = scmp.ne.s32.totalorder %s77, %s78
      %p90 = scmp.eq.s32.totalorder %s21, 7
      %p91 = por %p89, %p90
      %p93 = scmp.ne.s32.totalorder %s78, %s92
      %p94 = scmp.eq.s32.totalorder %s21, 0
      %p95 = por %p93, %p94
      %s97 = sadd.s32 %s96, 1
      %p100 = scmp.eq.s32.totalorder %s15, 7
      %p101 = scmp.ne.s32.totalorder %s96, %s98
      %p102 = scmp.eq.s32.totalorder %s15, 0
      %p103 = por %p101, %p102
      %p104 = scmp.ne.s32.totalorder %s96, %s98
      %p105 = scmp.eq.s32.totalorder %s20, 7
      %p106 = por %p104, %p105
      %p107 = scmp.ne.s32.totalorder %s98, %s99
      %p108 = scmp.eq.s32.totalorder %s20, 0
      %p109 = por %p107, %p108
      %p110 = scmp.ne.s32.totalorder %s98, %s99
      %p111 = scmp.eq.s32.totalorder %s21, 7
      %p112 = por %p110, %p111
      %p114 = scmp.ne.s32.totalorder %s99, %s113
      %p115 = scmp.eq.s32.totalorder %s21, 0
      %p116 = por %p114, %p115
      %s118 = sadd.s32 %s117, 1
      %p121 = scmp.eq.s32.totalorder %s15, 7
      %p122 = scmp.ne.s32.totalorder %s117, %s119
      %p123 = scmp.eq.s32.totalorder %s15, 0
      %p124 = por %p122, %p123
      %p125 = scmp.ne.s32.totalorder %s117, %s119
      %p126 = scmp.eq.s32.totalorder %s20, 7
      %p127 = por %p125, %p126
      %p128 = scmp.ne.s32.totalorder %s119, %s120
      %p129 = scmp.eq.s32.totalorder %s20, 0
      %p130 = por %p128, %p129
      %p131 = scmp.ne.s32.totalorder %s119, %s120
      %p132 = scmp.eq.s32.totalorder %s21, 7
      %p133 = por %p131, %p132
      %p135 = scmp.ne.s32.totalorder %s120, %s134
      %p136 = scmp.eq.s32.totalorder %s21, 0
      %p137 = por %p135, %p136
      %s139 = sadd.s32 %s138, 1
      %p142 = scmp.eq.s32.totalorder %s15, 7
      %p143 = scmp.ne.s32.totalorder %s138, %s140
      %p144 = scmp.eq.s32.totalorder %s15, 0
      %p145 = por %p143, %p144
      %p146 = scmp.ne.s32.totalorder %s138, %s140
      %p147 = scmp.eq.s32.totalorder %s20, 7
      %p148 = por %p146, %p147
      %p149 = scmp.ne.s32.totalorder %s140, %s141
      %p150 = scmp.eq.s32.totalorder %s20, 0
      %p151 = por %p149, %p150
      %p152 = scmp.ne.s32.totalorder %s140, %s141
      %p153 = scmp.eq.s32.totalorder %s21, 7
      %p154 = por %p152, %p153
      %p156 = scmp.ne.s32.totalorder %s141, %s155
      %p157 = scmp.eq.s32.totalorder %s21, 0
      %p158 = por %p156, %p157
      %s159 = ssub.s32 %s15, %s22
      %p160 = scmp.eq.s32.totalorder %s159, 0
      %s162 = sadd.s32 %s161, 1
      %s163 = scalar_select %p160, %s161, %s162
      %p166 = pneg %p160
      %p167 = scmp.eq.s32.totalorder %s15, 7
      %p168 = por %p166, %p167
      %p169 = scmp.ne.s32.totalorder %s161, %s164
      %p170 = scmp.eq.s32.totalorder %s15, 0
      %p171 = por %p169, %p170
      %p172 = scmp.ne.s32.totalorder %s161, %s164
      %p173 = scmp.eq.s32.totalorder %s20, 7
      %p174 = por %p172, %p173
      %p175 = scmp.ne.s32.totalorder %s164, %s165
      %p176 = scmp.eq.s32.totalorder %s20, 0
      %p177 = por %p175, %p176
      %p178 = scmp.ne.s32.totalorder %s164, %s165
      %p179 = scmp.eq.s32.totalorder %s21, 7
      %p180 = por %p178, %p179
      %p182 = scmp.ne.s32.totalorder %s165, %s181
      %p183 = scmp.eq.s32.totalorder %s21, 0
      %p184 = por %p182, %p183
      %p185 = scmp.le.s32.totalorder 1, %s15
      %p186 = scmp.lt.s32.totalorder %s15, 9
      %p187 = pnand %p185, %p186
      %p188 = pneg %p187
      // Predicated region
      $region9: #{afno_boundaries_block_forward.3} parent=5 // pred_check
        _
      $region10: #{afno_boundaries_block_forward.3} parent=5 // pred_check_branch
        %190 = sbr.rel (%p187) target = $region12
      $region11: #{afno_boundaries_block_forward.3} parent=5 // pred_region
        %s191 = ssub.s32 %s15, 1
        // Predicated region
        $region13: #{afno_boundaries_block_forward.3} parent=11 // pred_check
          %p192 = pneg %p88
        $region14: #{afno_boundaries_block_forward.3} parent=11 // pred_check_branch
          %194 = sbr.rel (%p192) target = $region16
        $region15: #{afno_boundaries_block_forward.3} parent=11 // pred_region
          _
        $region16: #{afno_boundaries_block_forward.3} parent=11 // pred_fallthru
          _
        // Predicated region
        $region17: #{afno_boundaries_block_forward.3} parent=11 // pred_check
          %p195 = pneg %p109
        $region18: #{afno_boundaries_block_forward.3} parent=11 // pred_check_branch
          %197 = sbr.rel (%p195) target = $region20
        $region19: #{afno_boundaries_block_forward.3} parent=11 // pred_region
          _
        $region20: #{afno_boundaries_block_forward.3} parent=11 // pred_fallthru
          _
        // Predicated region
        $region21: #{afno_boundaries_block_forward.3} parent=11 // pred_check
          %p198 = pneg %p130
        $region22: #{afno_boundaries_block_forward.3} parent=11 // pred_check_branch
          %200 = sbr.rel (%p198) target = $region24
        $region23: #{afno_boundaries_block_forward.3} parent=11 // pred_region
          _
        $region24: #{afno_boundaries_block_forward.3} parent=11 // pred_fallthru
          _
        // Predicated region
        $region25: #{afno_boundaries_block_forward.3} parent=11 // pred_check
          %p201 = pneg %p151
        $region26: #{afno_boundaries_block_forward.3} parent=11 // pred_check_branch
          %203 = sbr.rel (%p201) target = $region28
        $region27: #{afno_boundaries_block_forward.3} parent=11 // pred_region
          _
        $region28: #{afno_boundaries_block_forward.3} parent=11 // pred_fallthru
          _
      $region12: #{afno_boundaries_block_forward.3} parent=5 // pred_fallthru
        _
      %p204 = scmp.lt.s32.totalorder %s15, 8
      // Predicated region
      $region29: #{afno_boundaries_block_forward.3} parent=5 // pred_check
        %p205 = pneg %p204
      $region30: #{afno_boundaries_block_forward.3} parent=5 // pred_check_branch
        %207 = sbr.rel (%p205) target = $region32
      $region31: #{afno_boundaries_block_forward.3} parent=5 // pred_region
        // Predicated region
        $region33: #{afno_boundaries_block_forward.3} parent=31 // pred_check
          %p208 = pneg %p35
        $region34: #{afno_boundaries_block_forward.3} parent=31 // pred_check_branch
          %210 = sbr.rel (%p208) target = $region36
        $region35: #{afno_boundaries_block_forward.3} parent=31 // pred_region
          %s211 = smul.u32 8, %s15
          %p212 = scmp.lt.s32.totalorder %s211, 63
          %s213 = scalar_select %p212, %s211, 63
          %s214 = smul.addr %s213, 4
          %s215 = scalar_lea.vmem %s0, %s214
          %s216 = smul.u32 8, %s15
        $region36: #{afno_boundaries_block_forward.3} parent=31 // pred_fallthru
          _
        // Predicated region
        $region37: #{afno_boundaries_block_forward.3} parent=31 // pred_check
          %p217 = pneg %p61
        $region38: #{afno_boundaries_block_forward.3} parent=31 // pred_check_branch
          %219 = sbr.rel (%p217) target = $region40
        $region39: #{afno_boundaries_block_forward.3} parent=31 // pred_region
          %s220 = smul.u32 8, %s15
          %p221 = scmp.lt.s32.totalorder %s220, 63
          %s222 = scalar_select %p221, %s220, 63
          %s223 = smul.addr %s222, 4
          %s224 = scalar_lea.vmem %s1, %s223
          %s225 = smul.u32 8, %s15
        $region40: #{afno_boundaries_block_forward.3} parent=31 // pred_fallthru
          _
      $region32: #{afno_boundaries_block_forward.3} parent=5 // pred_fallthru
        _
      %p226 = scmp.le.s32.totalorder 1, %s15
      %p227 = scmp.lt.s32.totalorder %s15, 9
      %p228 = pnand %p226, %p227
      %p229 = pneg %p228
      // Predicated region
      $region41: #{afno_boundaries_block_forward.3} parent=5 // pred_check
        _
      $region42: #{afno_boundaries_block_forward.3} parent=5 // pred_check_branch
        %231 = sbr.rel (%p228) target = $region44
      $region43: #{afno_boundaries_block_forward.3} parent=5 // pred_region
        %s232 = ssub.s32 %s15, 1
        %s233 = smul.u32 8, %s20
        %p234 = scmp.lt.s32.totalorder %s233, 63
        %s235 = scalar_select %p234, %s233, 63
        %s236 = smul.addr %s235, 4
        %s237 = scalar_lea.vmem %s0, %s236
        %p238 = pneg %p41
        %p239 = pneg %p38
        %s240 = smul.u32 8, %s20
        %p241 = scmp.lt.s32.totalorder %s240, 63
        %s242 = scalar_select %p241, %s240, 63
        %s243 = smul.addr %s242, 4
        %s244 = scalar_lea.vmem %s1, %s243
        %p245 = pneg %p67
        %p246 = pneg %p64
        %p247 = pneg %p88
        %p248 = pneg %p85
        %p249 = pneg %p109
        %p250 = pneg %p106
        %p251 = pneg %p130
        %p252 = pneg %p127
        %p253 = pneg %p151
        %p254 = pneg %p148
        %p255 = pneg %p177
        %p256 = pneg %p174
        %s257 = sand.u32 %s164, 1
        %s258 = scalar_lea.sflag [#allocation3], %s257
        %s259 = sand.u32 %s164, 1
        %s260 = smul.addr %s259, 64
        %s261 = scalar_lea.vmem [#allocation2], %s260
        %s262 = smul.u32 8, %s20
        %p263 = scmp.lt.s32.totalorder %s262, 63
        %s264 = scalar_select %p263, %s262, 63
        %s265 = smul.addr %s264, 4
        %s266 = scalar_lea.vmem %s0, %s265
        %s267 = smul.u32 8, %s20
        %s268 = smul.u32 8, %s20
        %p269 = scmp.lt.s32.totalorder %s268, 63
        %s270 = scalar_select %p269, %s268, 63
        %s271 = smul.addr %s270, 4
        %s272 = scalar_lea.vmem %s1, %s271
        %s273 = smul.u32 8, %s20
        %s274 = smul.u32 8, %s20
        %v276 = vld [vmem:[%s266] sm:$0xf]
        %v277 = vld [vmem:[%s266 + $0x4] sm:$0xf]
        %v278 = vld [vmem:[%s266 + $0x8] sm:$0xf]
        %v279 = vld [vmem:[%s266 + $0xc] sm:$0xf]
        %v280 = vld [vmem:[%s266 + $0x10] sm:$0xf]
        %v281 = vld [vmem:[%s266 + $0x14] sm:$0xf]
        %v282 = vld [vmem:[%s266 + $0x18] sm:$0xf]
        %v283 = vld [vmem:[%s266 + $0x1c] sm:$0xf]
        %v284 = vunpack.c.l.bf16 %v276
        %v285 = vunpack.c.l.bf16 %v277
        %v286 = vunpack.c.l.bf16 %v278
        %v287 = vunpack.c.l.bf16 %v279
        %v288 = vunpack.c.l.bf16 %v280
        %v289 = vunpack.c.l.bf16 %v281
        %v290 = vunpack.c.l.bf16 %v282
        %v291 = vunpack.c.l.bf16 %v283
        %v292 = vld [vmem:[%s272] sm:$0xf]
        %v293 = vld [vmem:[%s272 + $0x4] sm:$0xf]
        %v294 = vld [vmem:[%s272 + $0x8] sm:$0xf]
        %v295 = vld [vmem:[%s272 + $0xc] sm:$0xf]
        %v296 = vld [vmem:[%s272 + $0x10] sm:$0xf]
        %v297 = vld [vmem:[%s272 + $0x14] sm:$0xf]
        %v298 = vld [vmem:[%s272 + $0x18] sm:$0xf]
        %v299 = vld [vmem:[%s272 + $0x1c] sm:$0xf]
        %v300 = vunpack.c.l.bf16 %v292
        %v301 = vunpack.c.l.bf16 %v293
        %v302 = vunpack.c.l.bf16 %v294
        %v303 = vunpack.c.l.bf16 %v295
        %v304 = vunpack.c.l.bf16 %v296
        %v305 = vunpack.c.l.bf16 %v297
        %v306 = vunpack.c.l.bf16 %v298
        %v307 = vunpack.c.l.bf16 %v299
        %v308 = vadd.f32 %v284, %v300
        %v309 = vadd.f32 %v285, %v301
        %v310 = vadd.f32 %v286, %v302
        %v311 = vadd.f32 %v287, %v303
        %v312 = vadd.f32 %v288, %v304
        %v313 = vadd.f32 %v289, %v305
        %v314 = vadd.f32 %v290, %v306
        %v315 = vadd.f32 %v291, %v307
        %v316 = vpack.c.bf16 %v309, %v308
        %v317 = vpack.c.bf16 %v311, %v310
        %v318 = vpack.c.bf16 %v313, %v312
        %v319 = vpack.c.bf16 %v315, %v314
        %v320 = vld [vmem:[%s2] sm:$0xf]
        %v321 = vld [vmem:[%s2 + $0x4] sm:$0xf]
        %v322 = vld [vmem:[%s2 + $0x8] sm:$0xf]
        %v323 = vld [vmem:[%s2 + $0xc] sm:$0xf]
        %v324 = vld [vmem:[%s3] sm:$0x1]
        %v326 = vperm.slane %v324, 0
        %v332 = vunpack.c.l.b16 %v320
        %v333 = vunpack.c.l.b16 %v321
        %v334 = vunpack.c.l.b16 %v322
        %v335 = vunpack.c.l.b16 %v323
        %v336 = vpack.c.b16 %v333, %v332
        %v337 = vpack.c.b16 %v335, %v334
        %vm340 = vcmask 261120
        %v342 = vsel %vm340, %v316, 0
        %v345 = vsel %vm340, %v317, 0
        %v348 = vsel %vm340, %v318, 0
        %v351 = vsel %vm340, %v319, 0
        %353 = vmatpush.bf16.msra.mxu0 0
        %354 = vmatpush.bf16.msra.mxu0 0
        %355 = vmatpush.bf16.msra.mxu0 0
        %356 = vmatpush.bf16.msra.mxu0 0
        %357 = vmatpush.bf16.msra.mxu0 0
        %358 = vmatpush.bf16.msra.mxu0 0
        %359 = vmatpush.bf16.msra.mxu0 %v337
        %360 = vmatpush.bf16.msra.mxu0 %v336
        %361 = vmatmul.bf16.gmra.mxu0 %v342
        %v362 = vpop.f32.mrf.mxu0
        %v363 = vadd.f32 %v326, %v362
        %v364 = vpop.f32.mrf.mxu0
        %v365 = vadd.f32 %v326, %v364
        %366 = vmatmul.bf16.gmra.mxu0 %v345
        %v367 = vpop.f32.mrf.mxu0
        %v368 = vadd.f32 %v326, %v367
        %v369 = vpop.f32.mrf.mxu0
        %v370 = vadd.f32 %v326, %v369
        %371 = vmatmul.bf16.gmra.mxu0 %v348
        %v372 = vpop.f32.mrf.mxu0
        %v373 = vadd.f32 %v326, %v372
        %v374 = vpop.f32.mrf.mxu0
        %v375 = vadd.f32 %v326, %v374
        %376 = vmatmul.bf16.gmra.mxu0 %v351
        %v377 = vpop.f32.mrf.mxu0
        %v378 = vadd.f32 %v326, %v377
        %v379 = vpop.f32.mrf.mxu0
        %v380 = vadd.f32 %v326, %v379
        %381 = vdwg.mxu0
        %v382 = vmul.f32 %v363, 0.5
        %v383 = vmul.f32 %v365, 0.5
        %v384 = vmul.f32 %v368, 0.5
        %v385 = vmul.f32 %v370, 0.5
        %v386 = vmul.f32 %v373, 0.5
        %v387 = vmul.f32 %v375, 0.5
        %v388 = vmul.f32 %v378, 0.5
        %v389 = vmul.f32 %v380, 0.5
        %v390 = vmul.f32 %v363, 0.70710677
        %v391 = vmul.f32 %v365, 0.70710677
        %v392 = vmul.f32 %v368, 0.70710677
        %v393 = vmul.f32 %v370, 0.70710677
        %v394 = vmul.f32 %v373, 0.70710677
        %v395 = vmul.f32 %v375, 0.70710677
        %v396 = vmul.f32 %v378, 0.70710677
        %v397 = vmul.f32 %v380, 0.70710677
        %vm398 = vcmp.ge.f32.partialorder %v390, 0.0
        %vm399 = vcmp.ge.f32.partialorder %v391, 0.0
        %vm400 = vcmp.ge.f32.partialorder %v392, 0.0
        %vm401 = vcmp.ge.f32.partialorder %v393, 0.0
        %vm402 = vcmp.ge.f32.partialorder %v394, 0.0
        %vm403 = vcmp.ge.f32.partialorder %v395, 0.0
        %vm404 = vcmp.ge.f32.partialorder %v396, 0.0
        %vm405 = vcmp.ge.f32.partialorder %v397, 0.0
        %v406 = vsel %vm398, 1.0, -1.0
        %v407 = vsel %vm399, 1.0, -1.0
        %v408 = vsel %vm400, 1.0, -1.0
        %v409 = vsel %vm401, 1.0, -1.0
        %v410 = vsel %vm402, 1.0, -1.0
        %v411 = vsel %vm403, 1.0, -1.0
        %v412 = vsel %vm404, 1.0, -1.0
        %v413 = vsel %vm405, 1.0, -1.0
        %v414 = vand.u32 2147483647, %v390
        %v415 = vand.u32 2147483647, %v391
        %v416 = vand.u32 2147483647, %v392
        %v417 = vand.u32 2147483647, %v393
        %v418 = vand.u32 2147483647, %v394
        %v419 = vand.u32 2147483647, %v395
        %v420 = vand.u32 2147483647, %v396
        %v421 = vand.u32 2147483647, %v397
        %v422 = vmul.f32 %v414, 0.3275911
        %v423 = vmul.f32 %v415, 0.3275911
        %v424 = vmul.f32 %v416, 0.3275911
        %v425 = vmul.f32 %v417, 0.3275911
        %v426 = vmul.f32 %v418, 0.3275911
        %v427 = vmul.f32 %v419, 0.3275911
        %v428 = vmul.f32 %v420, 0.3275911
        %v429 = vmul.f32 %v421, 0.3275911
        %v430 = vadd.f32 %v422, 1.0
        %v431 = vadd.f32 %v423, 1.0
        %v432 = vadd.f32 %v424, 1.0
        %v433 = vadd.f32 %v425, 1.0
        %v434 = vadd.f32 %v426, 1.0
        %v435 = vadd.f32 %v427, 1.0
        %v436 = vadd.f32 %v428, 1.0
        %v437 = vadd.f32 %v429, 1.0
        %v438 = vrcp.pop %v430
        %v439 = vrcp.pop %v431
        %v440 = vrcp.pop %v432
        %v441 = vrcp.pop %v433
        %v442 = vrcp.pop %v434
        %v443 = vrcp.pop %v435
        %v444 = vrcp.pop %v436
        %v445 = vrcp.pop %v437
        %v446 = vmul.f32 %v438, 1.0614054
        %v447 = vmul.f32 %v439, 1.0614054
        %v448 = vmul.f32 %v440, 1.0614054
        %v449 = vmul.f32 %v441, 1.0614054
        %v450 = vmul.f32 %v442, 1.0614054
        %v451 = vmul.f32 %v443, 1.0614054
        %v452 = vmul.f32 %v444, 1.0614054
        %v453 = vmul.f32 %v445, 1.0614054
        %v454 = vadd.f32 %v446, -1.4531521
        %v455 = vadd.f32 %v447, -1.4531521
        %v456 = vadd.f32 %v448, -1.4531521
        %v457 = vadd.f32 %v449, -1.4531521
        %v458 = vadd.f32 %v450, -1.4531521
        %v459 = vadd.f32 %v451, -1.4531521
        %v460 = vadd.f32 %v452, -1.4531521
        %v461 = vadd.f32 %v453, -1.4531521
        %v462 = vmul.f32 %v454, %v438
        %v463 = vmul.f32 %v455, %v439
        %v464 = vmul.f32 %v456, %v440
        %v465 = vmul.f32 %v457, %v441
        %v466 = vmul.f32 %v458, %v442
        %v467 = vmul.f32 %v459, %v443
        %v468 = vmul.f32 %v460, %v444
        %v469 = vmul.f32 %v461, %v445
        %v470 = vadd.f32 %v462, 1.4214138
        %v471 = vadd.f32 %v463, 1.4214138
        %v472 = vadd.f32 %v464, 1.4214138
        %v473 = vadd.f32 %v465, 1.4214138
        %v474 = vadd.f32 %v466, 1.4214138
        %v475 = vadd.f32 %v467, 1.4214138
        %v476 = vadd.f32 %v468, 1.4214138
        %v477 = vadd.f32 %v469, 1.4214138
        %v478 = vmul.f32 %v470, %v438
        %v479 = vmul.f32 %v471, %v439
        %v480 = vmul.f32 %v472, %v440
        %v481 = vmul.f32 %v473, %v441
        %v482 = vmul.f32 %v474, %v442
        %v483 = vmul.f32 %v475, %v443
        %v484 = vmul.f32 %v476, %v444
        %v485 = vmul.f32 %v477, %v445
        %v486 = vadd.f32 %v478, -0.28449672
        %v487 = vadd.f32 %v479, -0.28449672
        %v488 = vadd.f32 %v480, -0.28449672
        %v489 = vadd.f32 %v481, -0.28449672
        %v490 = vadd.f32 %v482, -0.28449672
        %v491 = vadd.f32 %v483, -0.28449672
        %v492 = vadd.f32 %v484, -0.28449672
        %v493 = vadd.f32 %v485, -0.28449672
        %v494 = vmul.f32 %v486, %v438
        %v495 = vmul.f32 %v487, %v439
        %v496 = vmul.f32 %v488, %v440
        %v497 = vmul.f32 %v489, %v441
        %v498 = vmul.f32 %v490, %v442
        %v499 = vmul.f32 %v491, %v443
        %v500 = vmul.f32 %v492, %v444
        %v501 = vmul.f32 %v493, %v445
        %v502 = vadd.f32 %v494, 0.2548296
        %v503 = vadd.f32 %v495, 0.2548296
        %v504 = vadd.f32 %v496, 0.2548296
        %v505 = vadd.f32 %v497, 0.2548296
        %v506 = vadd.f32 %v498, 0.2548296
        %v507 = vadd.f32 %v499, 0.2548296
        %v508 = vadd.f32 %v500, 0.2548296
        %v509 = vadd.f32 %v501, 0.2548296
        %v510 = vmul.f32 %v502, %v438
        %v511 = vmul.f32 %v503, %v439
        %v512 = vmul.f32 %v504, %v440
        %v513 = vmul.f32 %v505, %v441
        %v514 = vmul.f32 %v506, %v442
        %v515 = vmul.f32 %v507, %v443
        %v516 = vmul.f32 %v508, %v444
        %v517 = vmul.f32 %v509, %v445
        %v518 = vsub.f32 0.0, %v414
        %v519 = vsub.f32 0.0, %v415
        %v520 = vsub.f32 0.0, %v416
        %v521 = vsub.f32 0.0, %v417
        %v522 = vsub.f32 0.0, %v418
        %v523 = vsub.f32 0.0, %v419
        %v524 = vsub.f32 0.0, %v420
        %v525 = vsub.f32 0.0, %v421
        %v526 = vmul.f32 %v518, %v414
        %v527 = vmul.f32 %v519, %v415
        %v528 = vmul.f32 %v520, %v416
        %v529 = vmul.f32 %v521, %v417
        %v530 = vmul.f32 %v522, %v418
        %v531 = vmul.f32 %v523, %v419
        %v532 = vmul.f32 %v524, %v420
        %v533 = vmul.f32 %v525, %v421
        %v534 = vmul.f32 %v526, 1.442695
        %v535 = vpow.pop %v534
        %v536 = vmul.f32 %v527, 1.442695
        %v537 = vpow.pop %v536
        %v538 = vmul.f32 %v528, 1.442695
        %v539 = vpow.pop %v538
        %v540 = vmul.f32 %v529, 1.442695
        %v541 = vpow.pop %v540
        %v542 = vmul.f32 %v530, 1.442695
        %v543 = vpow.pop %v542
        %v544 = vmul.f32 %v531, 1.442695
        %v545 = vpow.pop %v544
        %v546 = vmul.f32 %v532, 1.442695
        %v547 = vpow.pop %v546
        %v548 = vmul.f32 %v533, 1.442695
        %v549 = vpow.pop %v548
        %v550 = vmul.f32 %v510, %v535
        %v551 = vmul.f32 %v511, %v537
        %v552 = vmul.f32 %v512, %v539
        %v553 = vmul.f32 %v513, %v541
        %v554 = vmul.f32 %v514, %v543
        %v555 = vmul.f32 %v515, %v545
        %v556 = vmul.f32 %v516, %v547
        %v557 = vmul.f32 %v517, %v549
        %v558 = vsub.f32 1.0, %v550
        %v559 = vsub.f32 1.0, %v551
        %v560 = vsub.f32 1.0, %v552
        %v561 = vsub.f32 1.0, %v553
        %v562 = vsub.f32 1.0, %v554
        %v563 = vsub.f32 1.0, %v555
        %v564 = vsub.f32 1.0, %v556
        %v565 = vsub.f32 1.0, %v557
        %v566 = vmul.f32 %v406, %v558
        %v567 = vmul.f32 %v407, %v559
        %v568 = vmul.f32 %v408, %v560
        %v569 = vmul.f32 %v409, %v561
        %v570 = vmul.f32 %v410, %v562
        %v571 = vmul.f32 %v411, %v563
        %v572 = vmul.f32 %v412, %v564
        %v573 = vmul.f32 %v413, %v565
        %v574 = vadd.f32 %v566, 1.0
        %v575 = vadd.f32 %v567, 1.0
        %v576 = vadd.f32 %v568, 1.0
        %v577 = vadd.f32 %v569, 1.0
        %v578 = vadd.f32 %v570, 1.0
        %v579 = vadd.f32 %v571, 1.0
        %v580 = vadd.f32 %v572, 1.0
        %v581 = vadd.f32 %v573, 1.0
        %v582 = vmul.f32 %v382, %v574
        %v583 = vmul.f32 %v383, %v575
        %v584 = vmul.f32 %v384, %v576
        %v585 = vmul.f32 %v385, %v577
        %v586 = vmul.f32 %v386, %v578
        %v587 = vmul.f32 %v387, %v579
        %v588 = vmul.f32 %v388, %v580
        %v589 = vmul.f32 %v389, %v581
        %v590 = vpack.c.bf16 %v583, %v582
        %v591 = vpack.c.bf16 %v585, %v584
        %v592 = vpack.c.bf16 %v587, %v586
        %v593 = vpack.c.bf16 %v589, %v588
        %v594 = vld [vmem:[%s4] sm:$0xf]
        %v595 = vld [vmem:[%s4 + $0x4] sm:$0xf]
        %v596 = vld [vmem:[%s4 + $0x8] sm:$0xf]
        %v597 = vld [vmem:[%s4 + $0xc] sm:$0xf]
        %v598 = vld [vmem:[%s4 + $0x10] sm:$0xf]
        %v599 = vld [vmem:[%s4 + $0x14] sm:$0xf]
        %v600 = vld [vmem:[%s4 + $0x18] sm:$0xf]
        %v601 = vld [vmem:[%s4 + $0x1c] sm:$0xf]
        %v602 = vld [vmem:[%s4 + $0x20] sm:$0xf]
        %v603 = vld [vmem:[%s4 + $0x24] sm:$0xf]
        %v604 = vld [vmem:[%s4 + $0x28] sm:$0xf]
        %v605 = vld [vmem:[%s4 + $0x2c] sm:$0xf]
        %v606 = vld [vmem:[%s4 + $0x30] sm:$0xf]
        %v607 = vld [vmem:[%s4 + $0x34] sm:$0xf]
        %v608 = vld [vmem:[%s4 + $0x38] sm:$0xf]
        %v609 = vld [vmem:[%s4 + $0x3c] sm:$0xf]
        %v610 = vld [vmem:[%s5] sm:$0x1]
        %v612 = vperm.slane %v610, 0
        %v630 = vunpack.c.l.b16 %v594
        %v631 = vunpack.c.l.b16 %v595
        %v632 = vunpack.c.l.b16 %v596
        %v633 = vunpack.c.l.b16 %v597
        %v634 = vunpack.c.l.b16 %v598
        %v635 = vunpack.c.l.b16 %v599
        %v636 = vunpack.c.l.b16 %v600
        %v637 = vunpack.c.l.b16 %v601
        %v638 = vunpack.c.l.b16 %v602
        %v639 = vunpack.c.l.b16 %v603
        %v640 = vunpack.c.l.b16 %v604
        %v641 = vunpack.c.l.b16 %v605
        %v642 = vunpack.c.l.b16 %v606
        %v643 = vunpack.c.l.b16 %v607
        %v644 = vunpack.c.l.b16 %v608
        %v645 = vunpack.c.l.b16 %v609
        %v646 = vpack.c.b16 %v631, %v630
        %v647 = vpack.c.b16 %v633, %v632
        %v648 = vpack.c.b16 %v635, %v634
        %v649 = vpack.c.b16 %v637, %v636
        %v650 = vpack.c.b16 %v639, %v638
        %v651 = vpack.c.b16 %v641, %v640
        %v652 = vpack.c.b16 %v643, %v642
        %v653 = vpack.c.b16 %v645, %v644
        %662 = vmatpush.bf16.msra.mxu0 %v653
        %663 = vmatpush.bf16.msra.mxu0 %v652
        %664 = vmatpush.bf16.msra.mxu0 %v651
        %665 = vmatpush.bf16.msra.mxu0 %v650
        %666 = vmatpush.bf16.msra.mxu0 %v649
        %667 = vmatpush.bf16.msra.mxu0 %v648
        %668 = vmatpush.bf16.msra.mxu0 %v647
        %669 = vmatpush.bf16.msra.mxu0 %v646
        %670 = vmatmul.bf16.gmra.mxu0 %v590
        %v671 = vpop.f32.mrf.mxu0
        %v672 = vadd.f32 %v612, %v671
        %v673 = vpop.f32.mrf.mxu0
        %v674 = vadd.f32 %v612, %v673
        %675 = vmatmul.bf16.gmra.mxu0 %v591
        %v676 = vpop.f32.mrf.mxu0
        %v677 = vadd.f32 %v612, %v676
        %v678 = vpop.f32.mrf.mxu0
        %v679 = vadd.f32 %v612, %v678
        %680 = vmatmul.bf16.gmra.mxu0 %v592
        %v681 = vpop.f32.mrf.mxu0
        %v682 = vadd.f32 %v612, %v681
        %v683 = vpop.f32.mrf.mxu0
        %v684 = vadd.f32 %v612, %v683
        %685 = vmatmul.bf16.gmra.mxu0 %v593
        %v686 = vpop.f32.mrf.mxu0
        %v687 = vadd.f32 %v612, %v686
        %v688 = vpop.f32.mrf.mxu0
        %v689 = vadd.f32 %v612, %v688
        %690 = vdwg.mxu0
        %691 = vst.msk [vmem:[%s261] sm:$0xff] %vm340, %v672
        %692 = vst.msk [vmem:[%s261 + $0x8] sm:$0xff] %vm340, %v674
        %693 = vst.msk [vmem:[%s261 + $0x10] sm:$0xff] %vm340, %v677
        %694 = vst.msk [vmem:[%s261 + $0x18] sm:$0xff] %vm340, %v679
        %695 = vst.msk [vmem:[%s261 + $0x20] sm:$0xff] %vm340, %v682
        %696 = vst.msk [vmem:[%s261 + $0x28] sm:$0xff] %vm340, %v684
        %697 = vst.msk [vmem:[%s261 + $0x30] sm:$0xff] %vm340, %v687
        %698 = vst.msk [vmem:[%s261 + $0x38] sm:$0xff] %vm340, %v689
        %s699 = sand.u32 %s164, 1
        %s700 = scalar_lea.sflag [#allocation3], %s699
        %s701 = sand.u32 %s164, 1
        %s702 = smul.addr %s701, 64
        %s703 = scalar_lea.vmem [#allocation2], %s702
        // Predicated region
        $region45: #{afno_boundaries_block_forward.3} parent=43 // pred_check
          %p704 = pneg %p174
        $region46: #{afno_boundaries_block_forward.3} parent=43 // pred_check_branch
          %706 = sbr.rel (%p704) target = $region48
        $region47: #{afno_boundaries_block_forward.3} parent=43 // pred_region
          %s707 = smul.u32 8, %s20
          %709 = vsyncadd %s700, 0
          %s710 = smul.addr %s707, 8
          %s711 = scalar_lea.hbm %s6, %s710
          %s712 = sshll.u32 %s703, 4
          %s713 = int_to_ptr.vmem [resolvable:$true] %s712
          %s714 = sshll.u32 %s711, 4
          %s715 = int_to_ptr.hbm [resolvable:$true] %s714
          %720 = dma.vmem_to_hbm [thread:$0]  %s713, 1024, %s715, %s700, 128, 128, 8
        $region48: #{afno_boundaries_block_forward.3} parent=43 // pred_fallthru
          _
      $region44: #{afno_boundaries_block_forward.3} parent=5 // pred_fallthru
        _
      %p721 = scmp.le.s32.totalorder 2, %s15
      // Predicated region
      $region49: #{afno_boundaries_block_forward.3} parent=5 // pred_check
        %p722 = pneg %p721
      $region50: #{afno_boundaries_block_forward.3} parent=5 // pred_check_branch
        %724 = sbr.rel (%p722) target = $region52
      $region51: #{afno_boundaries_block_forward.3} parent=5 // pred_region
        %s725 = ssub.s32 %s15, 2
        // Predicated region
        $region53: #{afno_boundaries_block_forward.3} parent=51 // pred_check
          %p726 = pneg %p180
        $region54: #{afno_boundaries_block_forward.3} parent=51 // pred_check_branch
          %728 = sbr.rel (%p726) target = $region56
        $region55: #{afno_boundaries_block_forward.3} parent=51 // pred_region
          %s729 = sand.u32 %s165, 1
          %s730 = scalar_lea.sflag [#allocation3], %s729
          %s731 = sand.u32 %s165, 1
          %s732 = smul.addr %s731, 64
          %s733 = scalar_lea.vmem [#allocation2], %s732
          %735 = dma.done %s730, 1024
        $region56: #{afno_boundaries_block_forward.3} parent=51 // pred_fallthru
          _
      $region52: #{afno_boundaries_block_forward.3} parent=5 // pred_fallthru
        _
    $region6: #{afno_boundaries_block_forward.3} parent=1 // loop_footer
      %s19 = sadd.s32 1, %s15
    $region7: #{afno_boundaries_block_forward.3} parent=1 // loop_footer_branch
      %14 = sbr.rel target = $region3
    $region8: #{afno_boundaries_block_forward.3} parent=1 // loop_exit
      _
    %736 = vsyncpa [#allocation3], 1
    %s737 = scalar_lea.sflag [#allocation3], 1
    %738 = vsyncpa %s737, 1

</llo_original>
